<compile_context>
chip_gen: v7x
topology: tpu7x:2x2x1
jax: 0.10.0
libtpu: 0.0.40
codegen_flags: <defaults>
</compile_context>

<pallas_src>
import functools

import numpy as np

import jax
import jax.numpy as jnp
from jax import lax
from jax.experimental import pallas as pl
from jax.experimental.pallas import tpu as pltpu  # noqa: F401  (fused kernel needs no TPU-specific params)


# ----------------------------------------------------------------------------
# Fused kernel: conv1+relu -> conv2+relu -> conv3+bias+relu -> batchnorm ->
#               residual add -> 2x2 maxpool.  Everything lives in VMEM.
# ----------------------------------------------------------------------------
def _downblock_kernel(x_ref, m1_ref, m2_ref, m3_ref, b1_ref, b3_ref,
                      gamma_ref, beta_ref, redm_ref, sup_ref, sdn_ref,
                      prowe_ref, prowo_ref, scole_ref, scolo_ref,
                      pool_ref, h_ref, *, W, Cout, count, eps):
    f32 = jnp.float32
    N = W * Cout                       # lane-dense trailing dim (= 128 in the test)

    s_up = sup_ref[...]                # (B*H, B*H) block-diag 0/1 shift matrix (dy = -1 tap)
    s_dn = sdn_ref[...]                # (B*H, B*H) block-diag 0/1 shift matrix (dy = +1 tap)

    def conv_band(a, mcat):
        # a: (B*H, W*Cin_layer)   mcat: (W*Cin_layer, 3*N)  -> (B*H, N)
        p = jnp.dot(a, mcat, preferred_element_type=f32)            # one MXU push / whole batch
        return (jnp.dot(s_up, p[:, 0:N], preferred_element_type=f32)
                + p[:, N:2 * N]
                + jnp.dot(s_dn, p[:, 2 * N:3 * N], preferred_element_type=f32))

    # ---- convolutions (dx taps + SAME-W padding folded into the band matrices) ----
    x1 = jnp.maximum(conv_band(x_ref[...], m1_ref[...]) + b1_ref[...], 0.0)   # relu(conv1)
    x2 = jnp.maximum(conv_band(x1, m2_ref[...]), 0.0)                         # relu(conv2), bias=False
    r = jnp.maximum(conv_band(x2, m3_ref[...]) + b3_ref[...], 0.0)            # relu(conv3)

    # ---- BatchNorm2d, training-mode batch statistics over (N, H, W) ----
    redm = redm_ref[...]               # (N, N) 0/1 same-channel reduction matrix
    inv_count = 1.0 / count
    mean_t = jnp.dot(r.sum(axis=0, keepdims=True), redm,
                     preferred_element_type=f32) * inv_count                  # per-channel mean, lane-tiled
    var_t = jnp.dot(jnp.square(r - mean_t).sum(axis=0, keepdims=True), redm,
                    preferred_element_type=f32) * inv_count                   # biased variance, lane-tiled

    scale = gamma_ref[...] * lax.rsqrt(var_t + eps)                # (1, N)
    shift = beta_ref[...] - mean_t * scale

    # ---- residual add + 2x2 max-pool (exact 0/1 selection matmuls) ----
    h = x1 + r * scale + shift                                     # (B*H, N), lane-dense store
    h_ref[...] = h

    rmax = jnp.maximum(jnp.dot(prowe_ref[...], h, preferred_element_type=f32),
                       jnp.dot(prowo_ref[...], h, preferred_element_type=f32))
    pool_ref[...] = jnp.maximum(
        jnp.dot(rmax, scole_ref[...], preferred_element_type=f32),
        jnp.dot(rmax, scolo_ref[...], preferred_element_type=f32))


# ----------------------------------------------------------------------------
# Weight preprocessing: 3x3 HWIO kernel -> banded matrix (W*Cin, 3*W*Cout).
# Pure weight-layout transform (dx taps + SAME W-padding folded into the band).
# ----------------------------------------------------------------------------
def _band_matrix(w_hwio, W):
    cols = []
    for dy in range(3):
        m = sum(jnp.kron(jnp.asarray(np.eye(W, W, k=1 - dx, dtype=np.float32)),
                         w_hwio[dy, dx]) for dx in range(3))
        cols.append(m)
    return jnp.concatenate(cols, axis=1)


# ----------------------------------------------------------------------------
# DownBlock forward (NCHW in / NCHW out, like the PyTorch module).
# ----------------------------------------------------------------------------
def downblock_forward(x_nchw, params, eps=1e-5):
    B, Cin, H, W = x_nchw.shape
    Cout = params["w1"].shape[-1]
    N = W * Cout
    Np = (W // 2) * Cout
    BH = B * H

    # Boundary glue: NCHW -> lane-dense (B*H, W*Cin), f32.
    x_flat = (jnp.transpose(x_nchw, (0, 2, 3, 1))
              .astype(jnp.float32).reshape(BH, W * Cin))

    # Banded conv weights + lane-tiled per-channel vectors (weights only, outside the kernel).
    m1 = _band_matrix(params["w1"], W)                              # (W*Cin, 3*N)
    m2 = _band_matrix(params["w2"], W)                              # (N, 3*N)
    m3 = _band_matrix(params["w3"], W)
    b1 = jnp.tile(params["b1"], W).reshape(1, N)
    b3 = jnp.tile(params["b3"], W).reshape(1, N)
    gamma = jnp.tile(params["gamma"], W).reshape(1, N)
    beta = jnp.tile(params["beta"], W).reshape(1, N)

    # Constant 0/1 selection / reduction matrices (exact under f32 matmul).
    redm = jnp.asarray(np.kron(np.ones((W, W), np.float32),
                               np.eye(Cout, dtype=np.float32)))     # same-channel reduction
    eye_b = np.eye(B, dtype=np.float32)
    s_up = jnp.asarray(np.kron(eye_b, np.eye(H, k=-1, dtype=np.float32)))   # dy=-1, per image
    s_dn = jnp.asarray(np.kron(eye_b, np.eye(H, k=1, dtype=np.float32)))    # dy=+1, per image
    eye_h = np.eye(H, dtype=np.float32)
    prow_e = jnp.asarray(np.kron(eye_b, eye_h[0::2]))               # even / odd row pick (per image)
    prow_o = jnp.asarray(np.kron(eye_b, eye_h[1::2]))
    sc = np.zeros((2, N, Np), np.float32)                           # even / odd W-group pick
    for xo in range(W // 2):
        for c in range(Cout):
            sc[0, (2 * xo) * Cout + c, xo * Cout + c] = 1.0
            sc[1, (2 * xo + 1) * Cout + c, xo * Cout + c] = 1.0
    scol_e = jnp.asarray(sc[0])
    scol_o = jnp.asarray(sc[1])

    pooled_flat, h_flat = pl.pallas_call(
        functools.partial(_downblock_kernel, W=W, Cout=Cout,
                          count=float(B * H * W), eps=eps),
        out_shape=(jax.ShapeDtypeStruct((BH // 2, Np), jnp.float32),
                   jax.ShapeDtypeStruct((BH, N), jnp.float32)),
    )(x_flat, m1, m2, m3, b1, b3, gamma, beta, redm, s_up, s_dn,
      prow_e, prow_o, scol_e, scol_o)

    h = jnp.transpose(h_flat.reshape(B, H, W, Cout), (0, 3, 1, 2))
    pooled = jnp.transpose(pooled_flat.reshape(B, H // 2, W // 2, Cout),
                           (0, 3, 1, 2))
    return pooled, h


# ----------------------------------------------------------------------------
# Pure-JAX reference for verification.
# ----------------------------------------------------------------------------
def downblock_reference(x_nchw, params, eps=1e-5):
    x = jnp.transpose(x_nchw, (0, 2, 3, 1)).astype(jnp.float32)

    def conv(v, w, b):
        y = lax.conv_general_dilated(
            v, w, (1, 1), "SAME",
            dimension_numbers=("NHWC", "HWIO", "NHWC"),
            precision=lax.Precision.HIGHEST)
        return y + b.reshape(1, 1, 1, -1)

    x1 = jax.nn.relu(conv(x, params["w1"], params["b1"]))
    x2 = jax.nn.relu(conv(x1, params["w2"], jnp.zeros_like(params["b1"])))
    r = jax.nn.relu(conv(x2, params["w3"], params["b3"]))
    mean = r.mean(axis=(0, 1, 2), keepdims=True)
    var = jnp.square(r - mean).mean(axis=(0, 1, 2), keepdims=True)
    h = x1 + (r - mean) / jnp.sqrt(var + eps) * params["gamma"] + params["beta"]
    B, H, W, C = h.shape
    pooled = h.reshape(B, H // 2, 2, W // 2, 2, C).max(axis=(2, 4))
    return (jnp.transpose(pooled, (0, 3, 1, 2)), jnp.transpose(h, (0, 3, 1, 2)))


if __name__ == "__main__":
    B, Cin, Cout, H, W = 2, 4, 8, 16, 16

    key = jax.random.PRNGKey(0)
    k_w1, k_b1, k_w2, k_w3, k_b3, k_x = jax.random.split(key, 6)

    params = {
        # Weights stored directly in HWIO (== PyTorch OIHW transposed); conv is
        # cross-correlation in both frameworks, so semantics match.
        "w1": 0.1 * jax.random.normal(k_w1, (3, 3, Cin, Cout), jnp.float32),
        "b1": 0.1 * jax.random.normal(k_b1, (Cout,), jnp.float32),
        "w2": 0.1 * jax.random.normal(k_w2, (3, 3, Cout, Cout), jnp.float32),
        "w3": 0.1 * jax.random.normal(k_w3, (3, 3, Cout, Cout), jnp.float32),
        "b3": 0.1 * jax.random.normal(k_b3, (Cout,), jnp.float32),
        "gamma": jnp.ones((Cout,), jnp.float32),   # nn.BatchNorm2d default init
        "beta": jnp.zeros((Cout,), jnp.float32),
    }

    x = jax.random.normal(k_x, (B, Cin, H, W), jnp.float32)

    fwd = jax.jit(downblock_forward)
    pooled, h = fwd(x, params)
    jax.block_until_ready(pooled)
    jax.block_until_ready(h)

    pooled_want, h_want = downblock_reference(x, params)
    assert pooled.shape == (B, Cout, H // 2, W // 2)
    assert h.shape == (B, Cout, H // 2 * 2, W // 2 * 2)
    # All-f32 pipeline; tolerance only covers accumulation-order differences.
    assert jnp.allclose(h, h_want, atol=5e-5, rtol=1e-5)
    assert jnp.allclose(pooled, pooled_want, atol=5e-5, rtol=1e-5)

    print("KERNEL_OK")
</pallas_src>

<mosaic_0001>
module attributes {stable_mosaic.version = 11 : i64} {
  func.func @_downblock_kernel(%arg0: memref<32x64xf32, #tpu.memory_space<vmem>>, %arg1: memref<64x384xf32, #tpu.memory_space<vmem>>, %arg2: memref<128x384xf32, #tpu.memory_space<vmem>>, %arg3: memref<128x384xf32, #tpu.memory_space<vmem>>, %arg4: memref<1x128xf32, #tpu.memory_space<vmem>>, %arg5: memref<1x128xf32, #tpu.memory_space<vmem>>, %arg6: memref<1x128xf32, #tpu.memory_space<vmem>>, %arg7: memref<1x128xf32, #tpu.memory_space<vmem>>, %arg8: memref<128x128xf32, #tpu.memory_space<vmem>>, %arg9: memref<32x32xf32, #tpu.memory_space<vmem>>, %arg10: memref<32x32xf32, #tpu.memory_space<vmem>>, %arg11: memref<16x32xf32, #tpu.memory_space<vmem>>, %arg12: memref<16x32xf32, #tpu.memory_space<vmem>>, %arg13: memref<128x64xf32, #tpu.memory_space<vmem>>, %arg14: memref<128x64xf32, #tpu.memory_space<vmem>>, %arg15: memref<16x64xf32, #tpu.memory_space<vmem>>, %arg16: memref<32x128xf32, #tpu.memory_space<vmem>>) attributes {dimension_semantics = [], scalar_prefetch = 0 : i64, scratch_operands = 0 : i64, tpu.core_type = #tpu.core_type<tc>} {
    %c0 = arith.constant 0 : index
    %c0_0 = arith.constant 0 : index
    %0 = vector.load %arg9[%c0, %c0_0] : memref<32x32xf32, #tpu.memory_space<vmem>>, vector<32x32xf32>
    %c0_1 = arith.constant 0 : index
    %c0_2 = arith.constant 0 : index
    %1 = vector.load %arg10[%c0_1, %c0_2] : memref<32x32xf32, #tpu.memory_space<vmem>>, vector<32x32xf32>
    %c0_3 = arith.constant 0 : index
    %c0_4 = arith.constant 0 : index
    %2 = vector.load %arg0[%c0_3, %c0_4] : memref<32x64xf32, #tpu.memory_space<vmem>>, vector<32x64xf32>
    %c0_5 = arith.constant 0 : index
    %c0_6 = arith.constant 0 : index
    %3 = vector.load %arg1[%c0_5, %c0_6] : memref<64x384xf32, #tpu.memory_space<vmem>>, vector<64x384xf32>
    %cst = arith.constant dense<0.000000e+00> : vector<32x384xf32>
    %4 = tpu.matmul %2, %3, %cst {dimension_numbers = #tpu.dot_dimension_numbers<[1], [0], [0], [1], [0, 0, 1, 1], [], []>} : vector<32x64xf32>, vector<64x384xf32>, vector<32x384xf32> -> vector<32x384xf32>
    %5 = vector.extract_strided_slice %4 {offsets = [0, 0], sizes = [32, 128], strides = [1, 1]} : vector<32x384xf32> to vector<32x128xf32>
    %cst_7 = arith.constant dense<0.000000e+00> : vector<32x128xf32>
    %6 = tpu.matmul %0, %5, %cst_7 {dimension_numbers = #tpu.dot_dimension_numbers<[1], [0], [0], [1], [0, 0, 1, 1], [], []>} : vector<32x32xf32>, vector<32x128xf32>, vector<32x128xf32> -> vector<32x128xf32>
    %7 = vector.extract_strided_slice %4 {offsets = [0, 128], sizes = [32, 128], strides = [1, 1]} : vector<32x384xf32> to vector<32x128xf32>
    %8 = arith.addf %6, %7 : vector<32x128xf32>
    %9 = vector.extract_strided_slice %4 {offsets = [0, 256], sizes = [32, 128], strides = [1, 1]} : vector<32x384xf32> to vector<32x128xf32>
    %cst_8 = arith.constant dense<0.000000e+00> : vector<32x128xf32>
    %10 = tpu.matmul %1, %9, %cst_8 {dimension_numbers = #tpu.dot_dimension_numbers<[1], [0], [0], [1], [0, 0, 1, 1], [], []>} : vector<32x32xf32>, vector<32x128xf32>, vector<32x128xf32> -> vector<32x128xf32>
    %11 = arith.addf %8, %10 : vector<32x128xf32>
    %c0_9 = arith.constant 0 : index
    %c0_10 = arith.constant 0 : index
    %12 = vector.load %arg4[%c0_9, %c0_10] : memref<1x128xf32, #tpu.memory_space<vmem>>, vector<1x128xf32>
    %13 = vector.broadcast %12 : vector<1x128xf32> to vector<32x128xf32>
    %14 = arith.addf %11, %13 : vector<32x128xf32>
    %cst_11 = arith.constant 0.000000e+00 : f32
    %15 = vector.broadcast %cst_11 : f32 to vector<32x128xf32>
    %16 = arith.maximumf %14, %15 : vector<32x128xf32>
    %c0_12 = arith.constant 0 : index
    %c0_13 = arith.constant 0 : index
    %17 = vector.load %arg2[%c0_12, %c0_13] : memref<128x384xf32, #tpu.memory_space<vmem>>, vector<128x384xf32>
    %cst_14 = arith.constant dense<0.000000e+00> : vector<32x384xf32>
    %18 = tpu.matmul %16, %17, %cst_14 {dimension_numbers = #tpu.dot_dimension_numbers<[1], [0], [0], [1], [0, 0, 1, 1], [], []>} : vector<32x128xf32>, vector<128x384xf32>, vector<32x384xf32> -> vector<32x384xf32>
    %19 = vector.extract_strided_slice %18 {offsets = [0, 0], sizes = [32, 128], strides = [1, 1]} : vector<32x384xf32> to vector<32x128xf32>
    %cst_15 = arith.constant dense<0.000000e+00> : vector<32x128xf32>
    %20 = tpu.matmul %0, %19, %cst_15 {dimension_numbers = #tpu.dot_dimension_numbers<[1], [0], [0], [1], [0, 0, 1, 1], [], []>} : vector<32x32xf32>, vector<32x128xf32>, vector<32x128xf32> -> vector<32x128xf32>
    %21 = vector.extract_strided_slice %18 {offsets = [0, 128], sizes = [32, 128], strides = [1, 1]} : vector<32x384xf32> to vector<32x128xf32>
    %22 = arith.addf %20, %21 : vector<32x128xf32>
    %23 = vector.extract_strided_slice %18 {offsets = [0, 256], sizes = [32, 128], strides = [1, 1]} : vector<32x384xf32> to vector<32x128xf32>
    %cst_16 = arith.constant dense<0.000000e+00> : vector<32x128xf32>
    %24 = tpu.matmul %1, %23, %cst_16 {dimension_numbers = #tpu.dot_dimension_numbers<[1], [0], [0], [1], [0, 0, 1, 1], [], []>} : vector<32x32xf32>, vector<32x128xf32>, vector<32x128xf32> -> vector<32x128xf32>
    %25 = arith.addf %22, %24 : vector<32x128xf32>
    %cst_17 = arith.constant 0.000000e+00 : f32
    %26 = vector.broadcast %cst_17 : f32 to vector<32x128xf32>
    %27 = arith.maximumf %25, %26 : vector<32x128xf32>
    %c0_18 = arith.constant 0 : index
    %c0_19 = arith.constant 0 : index
    %28 = vector.load %arg3[%c0_18, %c0_19] : memref<128x384xf32, #tpu.memory_space<vmem>>, vector<128x384xf32>
    %cst_20 = arith.constant dense<0.000000e+00> : vector<32x384xf32>
    %29 = tpu.matmul %27, %28, %cst_20 {dimension_numbers = #tpu.dot_dimension_numbers<[1], [0], [0], [1], [0, 0, 1, 1], [], []>} : vector<32x128xf32>, vector<128x384xf32>, vector<32x384xf32> -> vector<32x384xf32>
    %30 = vector.extract_strided_slice %29 {offsets = [0, 0], sizes = [32, 128], strides = [1, 1]} : vector<32x384xf32> to vector<32x128xf32>
    %cst_21 = arith.constant dense<0.000000e+00> : vector<32x128xf32>
    %31 = tpu.matmul %0, %30, %cst_21 {dimension_numbers = #tpu.dot_dimension_numbers<[1], [0], [0], [1], [0, 0, 1, 1], [], []>} : vector<32x32xf32>, vector<32x128xf32>, vector<32x128xf32> -> vector<32x128xf32>
    %32 = vector.extract_strided_slice %29 {offsets = [0, 128], sizes = [32, 128], strides = [1, 1]} : vector<32x384xf32> to vector<32x128xf32>
    %33 = arith.addf %31, %32 : vector<32x128xf32>
    %34 = vector.extract_strided_slice %29 {offsets = [0, 256], sizes = [32, 128], strides = [1, 1]} : vector<32x384xf32> to vector<32x128xf32>
    %cst_22 = arith.constant dense<0.000000e+00> : vector<32x128xf32>
    %35 = tpu.matmul %1, %34, %cst_22 {dimension_numbers = #tpu.dot_dimension_numbers<[1], [0], [0], [1], [0, 0, 1, 1], [], []>} : vector<32x32xf32>, vector<32x128xf32>, vector<32x128xf32> -> vector<32x128xf32>
    %36 = arith.addf %33, %35 : vector<32x128xf32>
    %c0_23 = arith.constant 0 : index
    %c0_24 = arith.constant 0 : index
    %37 = vector.load %arg5[%c0_23, %c0_24] : memref<1x128xf32, #tpu.memory_space<vmem>>, vector<1x128xf32>
    %38 = vector.broadcast %37 : vector<1x128xf32> to vector<32x128xf32>
    %39 = arith.addf %36, %38 : vector<32x128xf32>
    %cst_25 = arith.constant 0.000000e+00 : f32
    %40 = vector.broadcast %cst_25 : f32 to vector<32x128xf32>
    %41 = arith.maximumf %39, %40 : vector<32x128xf32>
    %c0_26 = arith.constant 0 : index
    %c0_27 = arith.constant 0 : index
    %42 = vector.load %arg8[%c0_26, %c0_27] : memref<128x128xf32, #tpu.memory_space<vmem>>, vector<128x128xf32>
    %cst_28 = arith.constant dense<0.000000e+00> : vector<128xf32>
    %43 = vector.multi_reduction <add>, %41, %cst_28 [0] : vector<32x128xf32> to vector<128xf32>
    %44 = vector.shape_cast %43 : vector<128xf32> to vector<1x128xf32>
    %cst_29 = arith.constant dense<0.000000e+00> : vector<1x128xf32>
    %45 = tpu.matmul %44, %42, %cst_29 {dimension_numbers = #tpu.dot_dimension_numbers<[1], [0], [0], [1], [0, 0, 1, 1], [], []>} : vector<1x128xf32>, vector<128x128xf32>, vector<1x128xf32> -> vector<1x128xf32>
    %cst_30 = arith.constant 0.001953125 : f32
    %46 = vector.broadcast %cst_30 : f32 to vector<1x128xf32>
    %47 = arith.mulf %45, %46 : vector<1x128xf32>
    %48 = vector.broadcast %47 : vector<1x128xf32> to vector<32x128xf32>
    %49 = arith.subf %41, %48 : vector<32x128xf32>
    %50 = arith.mulf %49, %49 : vector<32x128xf32>
    %cst_31 = arith.constant dense<0.000000e+00> : vector<128xf32>
    %51 = vector.multi_reduction <add>, %50, %cst_31 [0] : vector<32x128xf32> to vector<128xf32>
    %52 = vector.shape_cast %51 : vector<128xf32> to vector<1x128xf32>
    %cst_32 = arith.constant dense<0.000000e+00> : vector<1x128xf32>
    %53 = tpu.matmul %52, %42, %cst_32 {dimension_numbers = #tpu.dot_dimension_numbers<[1], [0], [0], [1], [0, 0, 1, 1], [], []>} : vector<1x128xf32>, vector<128x128xf32>, vector<1x128xf32> -> vector<1x128xf32>
    %cst_33 = arith.constant 0.001953125 : f32
    %54 = vector.broadcast %cst_33 : f32 to vector<1x128xf32>
    %55 = arith.mulf %53, %54 : vector<1x128xf32>
    %c0_34 = arith.constant 0 : index
    %c0_35 = arith.constant 0 : index
    %56 = vector.load %arg6[%c0_34, %c0_35] : memref<1x128xf32, #tpu.memory_space<vmem>>, vector<1x128xf32>
    %cst_36 = arith.constant 9.99999974E-6 : f32
    %57 = vector.broadcast %cst_36 : f32 to vector<1x128xf32>
    %58 = arith.addf %55, %57 : vector<1x128xf32>
    %59 = math.rsqrt %58 : vector<1x128xf32>
    %60 = arith.mulf %56, %59 : vector<1x128xf32>
    %c0_37 = arith.constant 0 : index
    %c0_38 = arith.constant 0 : index
    %61 = vector.load %arg7[%c0_37, %c0_38] : memref<1x128xf32, #tpu.memory_space<vmem>>, vector<1x128xf32>
    %62 = arith.mulf %47, %60 : vector<1x128xf32>
    %63 = arith.subf %61, %62 : vector<1x128xf32>
    %64 = vector.broadcast %60 : vector<1x128xf32> to vector<32x128xf32>
    %65 = arith.mulf %41, %64 : vector<32x128xf32>
    %66 = arith.addf %16, %65 : vector<32x128xf32>
    %67 = vector.broadcast %63 : vector<1x128xf32> to vector<32x128xf32>
    %68 = arith.addf %66, %67 : vector<32x128xf32>
    %c0_39 = arith.constant 0 : index
    %c0_40 = arith.constant 0 : index
    %69 = vector.load %arg16[%c0_39, %c0_40] : memref<32x128xf32, #tpu.memory_space<vmem>>, vector<32x128xf32>
    tpu.vector_store %arg16[%c0_39, %c0_40], %68 {strides = array<i32>} : memref<32x128xf32, #tpu.memory_space<vmem>>, vector<32x128xf32>,
    %c0_41 = arith.constant 0 : index
    %c0_42 = arith.constant 0 : index
    %70 = vector.load %arg11[%c0_41, %c0_42] : memref<16x32xf32, #tpu.memory_space<vmem>>, vector<16x32xf32>
    %cst_43 = arith.constant dense<0.000000e+00> : vector<16x128xf32>
    %71 = tpu.matmul %70, %68, %cst_43 {dimension_numbers = #tpu.dot_dimension_numbers<[1], [0], [0], [1], [0, 0, 1, 1], [], []>} : vector<16x32xf32>, vector<32x128xf32>, vector<16x128xf32> -> vector<16x128xf32>
    %c0_44 = arith.constant 0 : index
    %c0_45 = arith.constant 0 : index
    %72 = vector.load %arg12[%c0_44, %c0_45] : memref<16x32xf32, #tpu.memory_space<vmem>>, vector<16x32xf32>
    %cst_46 = arith.constant dense<0.000000e+00> : vector<16x128xf32>
    %73 = tpu.matmul %72, %68, %cst_46 {dimension_numbers = #tpu.dot_dimension_numbers<[1], [0], [0], [1], [0, 0, 1, 1], [], []>} : vector<16x32xf32>, vector<32x128xf32>, vector<16x128xf32> -> vector<16x128xf32>
    %74 = arith.maximumf %71, %73 : vector<16x128xf32>
    %c0_47 = arith.constant 0 : index
    %c0_48 = arith.constant 0 : index
    %75 = vector.load %arg13[%c0_47, %c0_48] : memref<128x64xf32, #tpu.memory_space<vmem>>, vector<128x64xf32>
    %cst_49 = arith.constant dense<0.000000e+00> : vector<16x64xf32>
    %76 = tpu.matmul %74, %75, %cst_49 {dimension_numbers = #tpu.dot_dimension_numbers<[1], [0], [0], [1], [0, 0, 1, 1], [], []>} : vector<16x128xf32>, vector<128x64xf32>, vector<16x64xf32> -> vector<16x64xf32>
    %c0_50 = arith.constant 0 : index
    %c0_51 = arith.constant 0 : index
    %77 = vector.load %arg14[%c0_50, %c0_51] : memref<128x64xf32, #tpu.memory_space<vmem>>, vector<128x64xf32>
    %cst_52 = arith.constant dense<0.000000e+00> : vector<16x64xf32>
    %78 = tpu.matmul %74, %77, %cst_52 {dimension_numbers = #tpu.dot_dimension_numbers<[1], [0], [0], [1], [0, 0, 1, 1], [], []>} : vector<16x128xf32>, vector<128x64xf32>, vector<16x64xf32> -> vector<16x64xf32>
    %79 = arith.maximumf %76, %78 : vector<16x64xf32>
    %c0_53 = arith.constant 0 : index
    %c0_54 = arith.constant 0 : index
    %80 = vector.load %arg15[%c0_53, %c0_54] : memref<16x64xf32, #tpu.memory_space<vmem>>, vector<16x64xf32>
    tpu.vector_store %arg15[%c0_53, %c0_54], %79 {strides = array<i32>} : memref<16x64xf32, #tpu.memory_space<vmem>>, vector<16x64xf32>,
    return
  }
}

</mosaic_0001>

<llo_original>
// kernel: tile.23
$region0: #{tile.23}
  #allocation0 [shape = 's32[1]{0}', space=sflag, size = 0x4, scoped, tag = 'scoped memory for tile.23']
  %s0 = inlined_call_operand.vmem [shape: f32[8], index: 0, kind: input, shape index: {}]
  %s1 = inlined_call_operand.vmem [shape: f32[16,8], index: 1, kind: output, shape index: {}]
  // Predicated region
  $region2: #{tile.23} parent=0 // pred_check
    _
  $region3: #{tile.23} parent=0 // pred_check_branch
    %3 = sbr.rel (0) target = $region5
  $region4: #{tile.23} parent=0 // pred_region
    _
  $region5: #{tile.23} parent=0 // pred_fallthru
    _
  %v4 = vld [vmem:[%s0] ss:$0 sm:$0xff]
  %5 = vst [vmem:[%s1] sm:$0xff] %v4
  %s6 = scalar_lea.vmem %s1, 8
  %7 = vst [vmem:[%s6] sm:$0xff] %v4

// kernel: tile.24
$region0: #{tile.24}
  %s0 = inlined_call_operand.vmem [shape: f32[16,8], index: 0, kind: input, shape index: {}]
  %s1 = inlined_call_operand.vmem [shape: f32[1,128], index: 1, kind: output, shape index: {}]
  $region1: #{tile.24} parent=0
    #allocation0 [shape = 'u8[4096]{0}', space=vmem, size = 0x1000, scoped, tag = 'scoped mem for output reshape']
    %v2 = vld [vmem:[%s0] sm:$0x1]
    %vm3 = vcmask 64512
    %4 = vst.msk [vmem:[#allocation0] sm:$0x1] %vm3, %v2
    %s5 = scalar_lea.vmem %s0, 15
    %v6 = vld [vmem:[%s5] sm:$0x1]
    %7 = vrot.lane.b32.xlu0 %v6, 120
    %v8 = vpop.permute.xlu0 %7
    %vm9 = vcmask 1048512
    %10 = vst.msk [vmem:[#allocation0] sm:$0x1] %vm9, %v8
    %s11 = scalar_lea.vmem %s0, 14
    %v12 = vld [vmem:[%s11] sm:$0x1]
    %13 = vrot.lane.b32.xlu0 %v12, 112
    %v14 = vpop.permute.xlu0 %13
    %vm15 = vcmask 982912
    %16 = vst.msk [vmem:[#allocation0] sm:$0x1] %vm15, %v14
    %s17 = scalar_lea.vmem %s0, 13
    %v18 = vld [vmem:[%s17] sm:$0x1]
    %19 = vrot.lane.b32.xlu0 %v18, 104
    %v20 = vpop.permute.xlu0 %19
    %vm21 = vcmask 917312
    %22 = vst.msk [vmem:[#allocation0] sm:$0x1] %vm21, %v20
    %s23 = scalar_lea.vmem %s0, 12
    %v24 = vld [vmem:[%s23] sm:$0x1]
    %25 = vrot.lane.b32.xlu0 %v24, 96
    %v26 = vpop.permute.xlu0 %25
    %vm27 = vcmask 851712
    %28 = vst.msk [vmem:[#allocation0] sm:$0x1] %vm27, %v26
    %s29 = scalar_lea.vmem %s0, 11
    %v30 = vld [vmem:[%s29] sm:$0x1]
    %31 = vrot.lane.b32.xlu0 %v30, 88
    %v32 = vpop.permute.xlu0 %31
    %vm33 = vcmask 786112
    %34 = vst.msk [vmem:[#allocation0] sm:$0x1] %vm33, %v32
    %s35 = scalar_lea.vmem %s0, 10
    %v36 = vld [vmem:[%s35] sm:$0x1]
    %37 = vrot.lane.b32.xlu0 %v36, 80
    %v38 = vpop.permute.xlu0 %37
    %vm39 = vcmask 720512
    %40 = vst.msk [vmem:[#allocation0] sm:$0x1] %vm39, %v38
    %s41 = scalar_lea.vmem %s0, 9
    %v42 = vld [vmem:[%s41] sm:$0x1]
    %43 = vrot.lane.b32.xlu0 %v42, 72
    %v44 = vpop.permute.xlu0 %43
    %vm45 = vcmask 654912
    %46 = vst.msk [vmem:[#allocation0] sm:$0x1] %vm45, %v44
    %s47 = scalar_lea.vmem %s0, 8
    %v48 = vld [vmem:[%s47] sm:$0x1]
    %49 = vrot.lane.b32.xlu0 %v48, 64
    %v50 = vpop.permute.xlu0 %49
    %vm51 = vcmask 589312
    %52 = vst.msk [vmem:[#allocation0] sm:$0x1] %vm51, %v50
    %s53 = scalar_lea.vmem %s0, 7
    %v54 = vld [vmem:[%s53] sm:$0x1]
    %55 = vrot.lane.b32.xlu0 %v54, 56
    %v56 = vpop.permute.xlu0 %55
    %vm57 = vcmask 523712
    %58 = vst.msk [vmem:[#allocation0] sm:$0x1] %vm57, %v56
    %s59 = scalar_lea.vmem %s0, 6
    %v60 = vld [vmem:[%s59] sm:$0x1]
    %61 = vrot.lane.b32.xlu0 %v60, 48
    %v62 = vpop.permute.xlu0 %61
    %vm63 = vcmask 458112
    %64 = vst.msk [vmem:[#allocation0] sm:$0x1] %vm63, %v62
    %s65 = scalar_lea.vmem %s0, 5
    %v66 = vld [vmem:[%s65] sm:$0x1]
    %67 = vrot.lane.b32.xlu0 %v66, 40
    %v68 = vpop.permute.xlu0 %67
    %vm69 = vcmask 392512
    %70 = vst.msk [vmem:[#allocation0] sm:$0x1] %vm69, %v68
    %s71 = scalar_lea.vmem %s0, 4
    %v72 = vld [vmem:[%s71] sm:$0x1]
    %73 = vrot.lane.b32.xlu0 %v72, 32
    %v74 = vpop.permute.xlu0 %73
    %vm75 = vcmask 326912
    %76 = vst.msk [vmem:[#allocation0] sm:$0x1] %vm75, %v74
    %s77 = scalar_lea.vmem %s0, 3
    %v78 = vld [vmem:[%s77] sm:$0x1]
    %79 = vrot.lane.b32.xlu0 %v78, 24
    %v80 = vpop.permute.xlu0 %79
    %vm81 = vcmask 261312
    %82 = vst.msk [vmem:[#allocation0] sm:$0x1] %vm81, %v80
    %s83 = scalar_lea.vmem %s0, 2
    %v84 = vld [vmem:[%s83] sm:$0x1]
    %85 = vrot.lane.b32.xlu0 %v84, 16
    %v86 = vpop.permute.xlu0 %85
    %vm87 = vcmask 195712
    %88 = vst.msk [vmem:[#allocation0] sm:$0x1] %vm87, %v86
    %s89 = scalar_lea.vmem %s0, 1
    %v90 = vld [vmem:[%s89] sm:$0x1]
    %91 = vrot.lane.b32.xlu0 %v90, 8
    %v92 = vpop.permute.xlu0 %91
    %vm93 = vcmask 130112
    %94 = vst.msk [vmem:[#allocation0] sm:$0x1] %vm93, %v92
    %s96 = sshllo.u32 0, 1
    %v98 = vld [vmem:[#allocation0] sm:%s96]
    %s99 = sshllo.u32 0, 1
    %100 = vst [vmem:[%s1] sm:%s99] %v98

// kernel: downblock_forward.1
$region0: #{downblock_forward.1}
  #allocation0 [shape = 'u32[]', space=smem, size = 0x4, offset = 0x4, fixed_abs, tag = 'smem constant byte address 0x4 - core index']
  #allocation1 [shape = 'u32[144,128]{1,0:T(1,128)}', space=vmem, size = 0x12000, scoped, tag = 'internal scratch']
  %s0 = inlined_call_operand.vmem [shape: f32[32,64], index: 0, kind: input, shape index: {}]
  %s1 = inlined_call_operand.vmem [shape: f32[64,384], index: 1, kind: input, shape index: {}]
  %s2 = inlined_call_operand.vmem [shape: f32[128,384], index: 2, kind: input, shape index: {}]
  %s3 = inlined_call_operand.vmem [shape: f32[128,384], index: 3, kind: input, shape index: {}]
  %s4 = inlined_call_operand.vmem [shape: f32[1,128], index: 4, kind: input, shape index: {}]
  %s5 = inlined_call_operand.vmem [shape: f32[1,128], index: 5, kind: input, shape index: {}]
  %s6 = inlined_call_operand.vmem [shape: f32[1,128], index: 6, kind: input, shape index: {}]
  %s7 = inlined_call_operand.vmem [shape: f32[1,128], index: 7, kind: input, shape index: {}]
  %s8 = inlined_call_operand.vmem [shape: f32[128,128], index: 8, kind: input, shape index: {}]
  %s9 = inlined_call_operand.vmem [shape: f32[32,32], index: 9, kind: input, shape index: {}]
  %s10 = inlined_call_operand.vmem [shape: f32[32,32], index: 10, kind: input, shape index: {}]
  %s11 = inlined_call_operand.vmem [shape: f32[16,32], index: 11, kind: input, shape index: {}]
  %s12 = inlined_call_operand.vmem [shape: f32[16,32], index: 12, kind: input, shape index: {}]
  %s13 = inlined_call_operand.vmem [shape: f32[128,64], index: 13, kind: input, shape index: {}]
  %s14 = inlined_call_operand.vmem [shape: f32[128,64], index: 14, kind: input, shape index: {}]
  %s15 = inlined_call_operand.vmem [shape: f32[16,64], index: 15, kind: output, shape index: {0}]
  %s16 = inlined_call_operand.vmem [shape: f32[32,128], index: 16, kind: output, shape index: {1}]
  %17 = xla_tuple %s15, %s16
  %s18 = sld [smem:[#allocation0]]
  $region78: #{downblock_forward.1} parent=0
    _
  %s20 = ssub.s32 1, %s18
  %s21 = scalar_select 0, %s20, %s18
  // Predicated region
  $region2: #{downblock_forward.1} parent=0 // pred_check
    _
  $region3: #{downblock_forward.1} parent=0 // pred_check_branch
    %23 = sbr.rel (0) target = $region5
  $region4: #{downblock_forward.1} parent=0 // pred_region
    _
  $region5: #{downblock_forward.1} parent=0 // pred_fallthru
    _
  // Predicated region
  $region6: #{downblock_forward.1} parent=0 // pred_check
    _
  $region7: #{downblock_forward.1} parent=0 // pred_check_branch
    %25 = sbr.rel (0) target = $region9
  $region8: #{downblock_forward.1} parent=0 // pred_region
    _
  $region9: #{downblock_forward.1} parent=0 // pred_fallthru
    _
  // Predicated region
  $region10: #{downblock_forward.1} parent=0 // pred_check
    _
  $region11: #{downblock_forward.1} parent=0 // pred_check_branch
    %27 = sbr.rel (0) target = $region13
  $region12: #{downblock_forward.1} parent=0 // pred_region
    _
  $region13: #{downblock_forward.1} parent=0 // pred_fallthru
    _
  // Predicated region
  $region14: #{downblock_forward.1} parent=0 // pred_check
    _
  $region15: #{downblock_forward.1} parent=0 // pred_check_branch
    %29 = sbr.rel (0) target = $region17
  $region16: #{downblock_forward.1} parent=0 // pred_region
    _
  $region17: #{downblock_forward.1} parent=0 // pred_fallthru
    _
  // Predicated region
  $region18: #{downblock_forward.1} parent=0 // pred_check
    _
  $region19: #{downblock_forward.1} parent=0 // pred_check_branch
    %31 = sbr.rel (0) target = $region21
  $region20: #{downblock_forward.1} parent=0 // pred_region
    _
  $region21: #{downblock_forward.1} parent=0 // pred_fallthru
    _
  // Predicated region
  $region22: #{downblock_forward.1} parent=0 // pred_check
    _
  $region23: #{downblock_forward.1} parent=0 // pred_check_branch
    %33 = sbr.rel (0) target = $region25
  $region24: #{downblock_forward.1} parent=0 // pred_region
    _
  $region25: #{downblock_forward.1} parent=0 // pred_fallthru
    _
  // Predicated region
  $region26: #{downblock_forward.1} parent=0 // pred_check
    _
  $region27: #{downblock_forward.1} parent=0 // pred_check_branch
    %35 = sbr.rel (0) target = $region29
  $region28: #{downblock_forward.1} parent=0 // pred_region
    _
  $region29: #{downblock_forward.1} parent=0 // pred_fallthru
    _
  // Predicated region
  $region30: #{downblock_forward.1} parent=0 // pred_check
    _
  $region31: #{downblock_forward.1} parent=0 // pred_check_branch
    %37 = sbr.rel (0) target = $region33
  $region32: #{downblock_forward.1} parent=0 // pred_region
    _
  $region33: #{downblock_forward.1} parent=0 // pred_fallthru
    _
  // Predicated region
  $region34: #{downblock_forward.1} parent=0 // pred_check
    _
  $region35: #{downblock_forward.1} parent=0 // pred_check_branch
    %39 = sbr.rel (0) target = $region37
  $region36: #{downblock_forward.1} parent=0 // pred_region
    _
  $region37: #{downblock_forward.1} parent=0 // pred_fallthru
    _
  // Predicated region
  $region38: #{downblock_forward.1} parent=0 // pred_check
    _
  $region39: #{downblock_forward.1} parent=0 // pred_check_branch
    %41 = sbr.rel (0) target = $region41
  $region40: #{downblock_forward.1} parent=0 // pred_region
    _
  $region41: #{downblock_forward.1} parent=0 // pred_fallthru
    _
  // Predicated region
  $region42: #{downblock_forward.1} parent=0 // pred_check
    _
  $region43: #{downblock_forward.1} parent=0 // pred_check_branch
    %43 = sbr.rel (0) target = $region45
  $region44: #{downblock_forward.1} parent=0 // pred_region
    _
  $region45: #{downblock_forward.1} parent=0 // pred_fallthru
    _
  // Predicated region
  $region46: #{downblock_forward.1} parent=0 // pred_check
    _
  $region47: #{downblock_forward.1} parent=0 // pred_check_branch
    %45 = sbr.rel (0) target = $region49
  $region48: #{downblock_forward.1} parent=0 // pred_region
    _
  $region49: #{downblock_forward.1} parent=0 // pred_fallthru
    _
  // Predicated region
  $region50: #{downblock_forward.1} parent=0 // pred_check
    _
  $region51: #{downblock_forward.1} parent=0 // pred_check_branch
    %47 = sbr.rel (0) target = $region53
  $region52: #{downblock_forward.1} parent=0 // pred_region
    _
  $region53: #{downblock_forward.1} parent=0 // pred_fallthru
    _
  // Predicated region
  $region54: #{downblock_forward.1} parent=0 // pred_check
    _
  $region55: #{downblock_forward.1} parent=0 // pred_check_branch
    %49 = sbr.rel (0) target = $region57
  $region56: #{downblock_forward.1} parent=0 // pred_region
    _
  $region57: #{downblock_forward.1} parent=0 // pred_fallthru
    _
  // Predicated region
  $region58: #{downblock_forward.1} parent=0 // pred_check
    _
  $region59: #{downblock_forward.1} parent=0 // pred_check_branch
    %51 = sbr.rel (0) target = $region61
  $region60: #{downblock_forward.1} parent=0 // pred_region
    _
  $region61: #{downblock_forward.1} parent=0 // pred_fallthru
    _
  %v52 = vld [vmem:[%s9] sm:$0xff]
  %v53 = vld [vmem:[%s9 + $0x8] sm:$0xff]
  %v54 = vld [vmem:[%s9 + $0x10] sm:$0xff]
  %v55 = vld [vmem:[%s9 + $0x18] sm:$0xff]
  %v56 = vld [vmem:[%s10] sm:$0xff]
  %v57 = vld [vmem:[%s10 + $0x8] sm:$0xff]
  %v58 = vld [vmem:[%s10 + $0x10] sm:$0xff]
  %v59 = vld [vmem:[%s10 + $0x18] sm:$0xff]
  %v60 = vld [vmem:[%s0] sm:$0xff]
  %v61 = vld [vmem:[%s0 + $0x8] sm:$0xff]
  %v62 = vld [vmem:[%s0 + $0x10] sm:$0xff]
  %v63 = vld [vmem:[%s0 + $0x18] sm:$0xff]
  %v64 = vld [vmem:[%s1] sm:$0xff]
  %v65 = vld [vmem:[%s1 + $0x8] sm:$0xff]
  %v66 = vld [vmem:[%s1 + $0x10] sm:$0xff]
  %v67 = vld [vmem:[%s1 + $0x18] sm:$0xff]
  %v68 = vld [vmem:[%s1 + $0x20] sm:$0xff]
  %v69 = vld [vmem:[%s1 + $0x28] sm:$0xff]
  %v70 = vld [vmem:[%s1 + $0x30] sm:$0xff]
  %v71 = vld [vmem:[%s1 + $0x38] sm:$0xff]
  %v72 = vld [vmem:[%s1 + $0x40] sm:$0xff]
  %v73 = vld [vmem:[%s1 + $0x48] sm:$0xff]
  %v74 = vld [vmem:[%s1 + $0x50] sm:$0xff]
  %v75 = vld [vmem:[%s1 + $0x58] sm:$0xff]
  %v76 = vld [vmem:[%s1 + $0x60] sm:$0xff]
  %v77 = vld [vmem:[%s1 + $0x68] sm:$0xff]
  %v78 = vld [vmem:[%s1 + $0x70] sm:$0xff]
  %v79 = vld [vmem:[%s1 + $0x78] sm:$0xff]
  %v80 = vld [vmem:[%s1 + $0x80] sm:$0xff]
  %v81 = vld [vmem:[%s1 + $0x88] sm:$0xff]
  %v82 = vld [vmem:[%s1 + $0x90] sm:$0xff]
  %v83 = vld [vmem:[%s1 + $0x98] sm:$0xff]
  %v84 = vld [vmem:[%s1 + $0xa0] sm:$0xff]
  %v85 = vld [vmem:[%s1 + $0xa8] sm:$0xff]
  %v86 = vld [vmem:[%s1 + $0xb0] sm:$0xff]
  %v87 = vld [vmem:[%s1 + $0xb8] sm:$0xff]
  %vm88 = vcmask 523264
  %v90 = vsel %vm88, %v60, 0
  %v93 = vsel %vm88, %v61, 0
  %v96 = vsel %vm88, %v62, 0
  %v99 = vsel %vm88, %v63, 0
  %101 = vmatprep.subr.mxu0 %v65
  %102 = vmatpush1.msra.mxu0 %v64
  %103 = vmatprep.subr.mxu0 %v68
  %104 = vmatpush1.msra.mxu0 %v67
  %105 = vmatprep.subr.mxu0 %v71
  %106 = vmatpush1.msra.mxu0 %v70
  %107 = vmatprep.subr.mxu0 %v74
  %108 = vmatpush1.msra.mxu0 %v73
  %109 = vmatprep.subr.mxu0 %v77
  %110 = vmatpush1.msra.mxu0 %v76
  %111 = vmatprep.subr.mxu0 %v80
  %112 = vmatpush1.msra.mxu0 %v79
  %113 = vmatprep.subr.mxu0 %v83
  %114 = vmatpush1.msra.mxu0 %v82
  %115 = vmatprep.subr.mxu0 %v86
  %116 = vmatpush1.msra.mxu0 %v85
  %117 = vmatprep.subr.mxu0 0.0
  %118 = vmatpush1.msra.mxu0 0.0
  %119 = vmatprep.subr.mxu0 0.0
  %120 = vmatpush1.msra.mxu0 0.0
  %121 = vmatprep.subr.mxu0 0.0
  %122 = vmatpush1.msra.mxu0 0.0
  %123 = vmatprep.subr.mxu0 0.0
  %124 = vmatpush1.msra.mxu0 0.0
  %125 = vmatprep.subr.mxu0 0.0
  %126 = vmatpush1.msra.mxu0 0.0
  %127 = vmatprep.subr.mxu0 0.0
  %128 = vmatpush1.msra.mxu0 0.0
  %129 = vmatprep.subr.mxu0 0.0
  %130 = vmatpush1.msra.mxu0 0.0
  %131 = vmatprep.subr.mxu0 0.0
  %132 = vmatpush1.msra.mxu0 0.0
  %133 = vmatprep.subr.mxu0 0.0
  %134 = vmatpush1.msra.mxu0 0.0
  %135 = vmatprep.subr.mxu0 0.0
  %136 = vmatpush1.msra.mxu0 0.0
  %137 = vmatprep.subr.mxu0 0.0
  %138 = vmatpush1.msra.mxu0 0.0
  %139 = vmatprep.subr.mxu0 0.0
  %140 = vmatpush1.msra.mxu0 0.0
  %141 = vmatprep.subr.mxu0 0.0
  %142 = vmatpush1.msra.mxu0 0.0
  %143 = vmatprep.subr.mxu0 0.0
  %144 = vmatpush1.msra.mxu0 0.0
  %145 = vmatprep.subr.mxu0 0.0
  %146 = vmatpush1.msra.mxu0 0.0
  %147 = vmatprep.subr.mxu0 0.0
  %148 = vmatpush1.msra.mxu0 0.0
  %149 = vmatprep.subr.mxu0 0.0
  %150 = vmatpush1.msra.mxu0 0.0
  %151 = vmatprep.subr.mxu0 0.0
  %152 = vmatpush1.msra.mxu0 0.0
  %153 = vmatprep.subr.mxu0 0.0
  %154 = vmatpush1.msra.mxu0 0.0
  %155 = vmatprep.subr.mxu0 0.0
  %156 = vmatpush1.msra.mxu0 0.0
  %157 = vmatprep.subr.mxu0 0.0
  %158 = vmatpush1.msra.mxu0 0.0
  %159 = vmatprep.subr.mxu0 0.0
  %160 = vmatpush1.msra.mxu0 0.0
  %161 = vmatprep.subr.mxu0 0.0
  %162 = vmatpush1.msra.mxu0 0.0
  %163 = vmatprep.subr.mxu0 0.0
  %164 = vmatpush1.msra.mxu0 0.0
  %165 = vmatprep.mubr.f32.mxu0 0.0
  %166 = vmatmul.mubr.f32.gmra.mrb[0].mxu0 %v90
  %v167 = vpop.f32.mrb[0].mxu0
  %v168 = vadd.f32 0.0, %v167
  %v169 = vpop.f32.mrb[0].mxu0
  %v170 = vadd.f32 0.0, %v169
  %171 = vmatprep.mubr.f32.mxu0 0.0
  %172 = vmatmul.mubr.f32.gmra.mrb[0].mxu0 %v93
  %v173 = vpop.f32.mrb[0].mxu0
  %v174 = vadd.f32 0.0, %v173
  %v175 = vpop.f32.mrb[0].mxu0
  %v176 = vadd.f32 0.0, %v175
  %177 = vmatprep.mubr.f32.mxu0 0.0
  %178 = vmatmul.mubr.f32.gmra.mrb[0].mxu0 %v96
  %v179 = vpop.f32.mrb[0].mxu0
  %v180 = vadd.f32 0.0, %v179
  %v181 = vpop.f32.mrb[0].mxu0
  %v182 = vadd.f32 0.0, %v181
  %183 = vmatprep.mubr.f32.mxu0 0.0
  %184 = vmatmul.mubr.f32.gmra.mrb[0].mxu0 %v99
  %v185 = vpop.f32.mrb[0].mxu0
  %v186 = vadd.f32 0.0, %v185
  %v187 = vpop.f32.mrb[0].mxu0
  %v188 = vadd.f32 0.0, %v187
  %189 = vdwg.mxu0
  %190 = vmatprep.subr.mxu0 0.0
  %191 = vmatpush1.msra.mxu0 %v66
  %192 = vmatprep.subr.mxu0 0.0
  %193 = vmatpush1.msra.mxu0 %v69
  %194 = vmatprep.subr.mxu0 0.0
  %195 = vmatpush1.msra.mxu0 %v72
  %196 = vmatprep.subr.mxu0 0.0
  %197 = vmatpush1.msra.mxu0 %v75
  %198 = vmatprep.subr.mxu0 0.0
  %199 = vmatpush1.msra.mxu0 %v78
  %200 = vmatprep.subr.mxu0 0.0
  %201 = vmatpush1.msra.mxu0 %v81
  %202 = vmatprep.subr.mxu0 0.0
  %203 = vmatpush1.msra.mxu0 %v84
  %204 = vmatprep.subr.mxu0 0.0
  %205 = vmatpush1.msra.mxu0 %v87
  %206 = vmatprep.subr.mxu0 0.0
  %207 = vmatpush1.msra.mxu0 0.0
  %208 = vmatprep.subr.mxu0 0.0
  %209 = vmatpush1.msra.mxu0 0.0
  %210 = vmatprep.subr.mxu0 0.0
  %211 = vmatpush1.msra.mxu0 0.0
  %212 = vmatprep.subr.mxu0 0.0
  %213 = vmatpush1.msra.mxu0 0.0
  %214 = vmatprep.subr.mxu0 0.0
  %215 = vmatpush1.msra.mxu0 0.0
  %216 = vmatprep.subr.mxu0 0.0
  %217 = vmatpush1.msra.mxu0 0.0
  %218 = vmatprep.subr.mxu0 0.0
  %219 = vmatpush1.msra.mxu0 0.0
  %220 = vmatprep.subr.mxu0 0.0
  %221 = vmatpush1.msra.mxu0 0.0
  %222 = vmatprep.subr.mxu0 0.0
  %223 = vmatpush1.msra.mxu0 0.0
  %224 = vmatprep.subr.mxu0 0.0
  %225 = vmatpush1.msra.mxu0 0.0
  %226 = vmatprep.subr.mxu0 0.0
  %227 = vmatpush1.msra.mxu0 0.0
  %228 = vmatprep.subr.mxu0 0.0
  %229 = vmatpush1.msra.mxu0 0.0
  %230 = vmatprep.subr.mxu0 0.0
  %231 = vmatpush1.msra.mxu0 0.0
  %232 = vmatprep.subr.mxu0 0.0
  %233 = vmatpush1.msra.mxu0 0.0
  %234 = vmatprep.subr.mxu0 0.0
  %235 = vmatpush1.msra.mxu0 0.0
  %236 = vmatprep.subr.mxu0 0.0
  %237 = vmatpush1.msra.mxu0 0.0
  %238 = vmatprep.subr.mxu0 0.0
  %239 = vmatpush1.msra.mxu0 0.0
  %240 = vmatprep.subr.mxu0 0.0
  %241 = vmatpush1.msra.mxu0 0.0
  %242 = vmatprep.subr.mxu0 0.0
  %243 = vmatpush1.msra.mxu0 0.0
  %244 = vmatprep.subr.mxu0 0.0
  %245 = vmatpush1.msra.mxu0 0.0
  %246 = vmatprep.subr.mxu0 0.0
  %247 = vmatpush1.msra.mxu0 0.0
  %248 = vmatprep.subr.mxu0 0.0
  %249 = vmatpush1.msra.mxu0 0.0
  %250 = vmatprep.subr.mxu0 0.0
  %251 = vmatpush1.msra.mxu0 0.0
  %252 = vmatprep.subr.mxu0 0.0
  %253 = vmatpush1.msra.mxu0 0.0
  %254 = vmatprep.mubr.f32.mxu0 0.0
  %255 = vmatmul.mubr.f32.gmra.mrb[0].mxu0 %v90
  %v256 = vpop.f32.mrb[0].mxu0
  %v257 = vadd.f32 0.0, %v256
  %v258 = vpop.f32.mrb[0].mxu0
  %259 = vmatprep.mubr.f32.mxu0 0.0
  %260 = vmatmul.mubr.f32.gmra.mrb[0].mxu0 %v93
  %v261 = vpop.f32.mrb[0].mxu0
  %v262 = vadd.f32 0.0, %v261
  %v263 = vpop.f32.mrb[0].mxu0
  %264 = vmatprep.mubr.f32.mxu0 0.0
  %265 = vmatmul.mubr.f32.gmra.mrb[0].mxu0 %v96
  %v266 = vpop.f32.mrb[0].mxu0
  %v267 = vadd.f32 0.0, %v266
  %v268 = vpop.f32.mrb[0].mxu0
  %269 = vmatprep.mubr.f32.mxu0 0.0
  %270 = vmatmul.mubr.f32.gmra.mrb[0].mxu0 %v99
  %v271 = vpop.f32.mrb[0].mxu0
  %v272 = vadd.f32 0.0, %v271
  %v273 = vpop.f32.mrb[0].mxu0
  %274 = vdwg.mxu0
  %vm275 = vcmask 261120
  %v277 = vsel %vm275, %v52, 0
  %v280 = vsel %vm275, %v53, 0
  %v283 = vsel %vm275, %v54, 0
  %v286 = vsel %vm275, %v55, 0
  %288 = vmatprep.subr.mxu0 0.0
  %289 = vmatpush1.msra.mxu0 %v168
  %290 = vmatprep.subr.mxu0 0.0
  %291 = vmatpush1.msra.mxu0 %v174
  %292 = vmatprep.subr.mxu0 0.0
  %293 = vmatpush1.msra.mxu0 %v180
  %294 = vmatprep.subr.mxu0 0.0
  %295 = vmatpush1.msra.mxu0 %v186
  %296 = vmatprep.subr.mxu0 0.0
  %297 = vmatpush1.msra.mxu0 0.0
  %298 = vmatprep.subr.mxu0 0.0
  %299 = vmatpush1.msra.mxu0 0.0
  %300 = vmatprep.subr.mxu0 0.0
  %301 = vmatpush1.msra.mxu0 0.0
  %302 = vmatprep.subr.mxu0 0.0
  %303 = vmatpush1.msra.mxu0 0.0
  %304 = vmatprep.subr.mxu0 0.0
  %305 = vmatpush1.msra.mxu0 0.0
  %306 = vmatprep.subr.mxu0 0.0
  %307 = vmatpush1.msra.mxu0 0.0
  %308 = vmatprep.subr.mxu0 0.0
  %309 = vmatpush1.msra.mxu0 0.0
  %310 = vmatprep.subr.mxu0 0.0
  %311 = vmatpush1.msra.mxu0 0.0
  %312 = vmatprep.subr.mxu0 0.0
  %313 = vmatpush1.msra.mxu0 0.0
  %314 = vmatprep.subr.mxu0 0.0
  %315 = vmatpush1.msra.mxu0 0.0
  %316 = vmatprep.subr.mxu0 0.0
  %317 = vmatpush1.msra.mxu0 0.0
  %318 = vmatprep.subr.mxu0 0.0
  %319 = vmatpush1.msra.mxu0 0.0
  %320 = vmatprep.subr.mxu0 0.0
  %321 = vmatpush1.msra.mxu0 0.0
  %322 = vmatprep.subr.mxu0 0.0
  %323 = vmatpush1.msra.mxu0 0.0
  %324 = vmatprep.subr.mxu0 0.0
  %325 = vmatpush1.msra.mxu0 0.0
  %326 = vmatprep.subr.mxu0 0.0
  %327 = vmatpush1.msra.mxu0 0.0
  %328 = vmatprep.subr.mxu0 0.0
  %329 = vmatpush1.msra.mxu0 0.0
  %330 = vmatprep.subr.mxu0 0.0
  %331 = vmatpush1.msra.mxu0 0.0
  %332 = vmatprep.subr.mxu0 0.0
  %333 = vmatpush1.msra.mxu0 0.0
  %334 = vmatprep.subr.mxu0 0.0
  %335 = vmatpush1.msra.mxu0 0.0
  %336 = vmatprep.subr.mxu0 0.0
  %337 = vmatpush1.msra.mxu0 0.0
  %338 = vmatprep.subr.mxu0 0.0
  %339 = vmatpush1.msra.mxu0 0.0
  %340 = vmatprep.subr.mxu0 0.0
  %341 = vmatpush1.msra.mxu0 0.0
  %342 = vmatprep.subr.mxu0 0.0
  %343 = vmatpush1.msra.mxu0 0.0
  %344 = vmatprep.subr.mxu0 0.0
  %345 = vmatpush1.msra.mxu0 0.0
  %346 = vmatprep.subr.mxu0 0.0
  %347 = vmatpush1.msra.mxu0 0.0
  %348 = vmatprep.subr.mxu0 0.0
  %349 = vmatpush1.msra.mxu0 0.0
  %350 = vmatprep.subr.mxu0 0.0
  %351 = vmatpush1.msra.mxu0 0.0
  %352 = vmatprep.mubr.f32.mxu0 0.0
  %353 = vmatmul.mubr.f32.gmra.mrb[0].mxu0 %v277
  %v354 = vpop.f32.mrb[0].mxu0
  %v355 = vadd.f32 %v170, %v354
  %v356 = vpop.f32.mrb[0].mxu0
  %357 = vmatprep.mubr.f32.mxu0 0.0
  %358 = vmatmul.mubr.f32.gmra.mrb[0].mxu0 %v280
  %v359 = vpop.f32.mrb[0].mxu0
  %v360 = vadd.f32 %v176, %v359
  %v361 = vpop.f32.mrb[0].mxu0
  %362 = vmatprep.mubr.f32.mxu0 0.0
  %363 = vmatmul.mubr.f32.gmra.mrb[0].mxu0 %v283
  %v364 = vpop.f32.mrb[0].mxu0
  %v365 = vadd.f32 %v182, %v364
  %v366 = vpop.f32.mrb[0].mxu0
  %367 = vmatprep.mubr.f32.mxu0 0.0
  %368 = vmatmul.mubr.f32.gmra.mrb[0].mxu0 %v286
  %v369 = vpop.f32.mrb[0].mxu0
  %v370 = vadd.f32 %v188, %v369
  %v371 = vpop.f32.mrb[0].mxu0
  %372 = vdwg.mxu0
  %v374 = vsel %vm275, %v56, 0
  %v377 = vsel %vm275, %v57, 0
  %v380 = vsel %vm275, %v58, 0
  %v383 = vsel %vm275, %v59, 0
  %385 = vmatprep.subr.mxu0 0.0
  %386 = vmatpush1.msra.mxu0 %v257
  %387 = vmatprep.subr.mxu0 0.0
  %388 = vmatpush1.msra.mxu0 %v262
  %389 = vmatprep.subr.mxu0 0.0
  %390 = vmatpush1.msra.mxu0 %v267
  %391 = vmatprep.subr.mxu0 0.0
  %392 = vmatpush1.msra.mxu0 %v272
  %393 = vmatprep.subr.mxu0 0.0
  %394 = vmatpush1.msra.mxu0 0.0
  %395 = vmatprep.subr.mxu0 0.0
  %396 = vmatpush1.msra.mxu0 0.0
  %397 = vmatprep.subr.mxu0 0.0
  %398 = vmatpush1.msra.mxu0 0.0
  %399 = vmatprep.subr.mxu0 0.0
  %400 = vmatpush1.msra.mxu0 0.0
  %401 = vmatprep.subr.mxu0 0.0
  %402 = vmatpush1.msra.mxu0 0.0
  %403 = vmatprep.subr.mxu0 0.0
  %404 = vmatpush1.msra.mxu0 0.0
  %405 = vmatprep.subr.mxu0 0.0
  %406 = vmatpush1.msra.mxu0 0.0
  %407 = vmatprep.subr.mxu0 0.0
  %408 = vmatpush1.msra.mxu0 0.0
  %409 = vmatprep.subr.mxu0 0.0
  %410 = vmatpush1.msra.mxu0 0.0
  %411 = vmatprep.subr.mxu0 0.0
  %412 = vmatpush1.msra.mxu0 0.0
  %413 = vmatprep.subr.mxu0 0.0
  %414 = vmatpush1.msra.mxu0 0.0
  %415 = vmatprep.subr.mxu0 0.0
  %416 = vmatpush1.msra.mxu0 0.0
  %417 = vmatprep.subr.mxu0 0.0
  %418 = vmatpush1.msra.mxu0 0.0
  %419 = vmatprep.subr.mxu0 0.0
  %420 = vmatpush1.msra.mxu0 0.0
  %421 = vmatprep.subr.mxu0 0.0
  %422 = vmatpush1.msra.mxu0 0.0
  %423 = vmatprep.subr.mxu0 0.0
  %424 = vmatpush1.msra.mxu0 0.0
  %425 = vmatprep.subr.mxu0 0.0
  %426 = vmatpush1.msra.mxu0 0.0
  %427 = vmatprep.subr.mxu0 0.0
  %428 = vmatpush1.msra.mxu0 0.0
  %429 = vmatprep.subr.mxu0 0.0
  %430 = vmatpush1.msra.mxu0 0.0
  %431 = vmatprep.subr.mxu0 0.0
  %432 = vmatpush1.msra.mxu0 0.0
  %433 = vmatprep.subr.mxu0 0.0
  %434 = vmatpush1.msra.mxu0 0.0
  %435 = vmatprep.subr.mxu0 0.0
  %436 = vmatpush1.msra.mxu0 0.0
  %437 = vmatprep.subr.mxu0 0.0
  %438 = vmatpush1.msra.mxu0 0.0
  %439 = vmatprep.subr.mxu0 0.0
  %440 = vmatpush1.msra.mxu0 0.0
  %441 = vmatprep.subr.mxu0 0.0
  %442 = vmatpush1.msra.mxu0 0.0
  %443 = vmatprep.subr.mxu0 0.0
  %444 = vmatpush1.msra.mxu0 0.0
  %445 = vmatprep.subr.mxu0 0.0
  %446 = vmatpush1.msra.mxu0 0.0
  %447 = vmatprep.subr.mxu0 0.0
  %448 = vmatpush1.msra.mxu0 0.0
  %449 = vmatprep.mubr.f32.mxu0 0.0
  %450 = vmatmul.mubr.f32.gmra.mrb[0].mxu0 %v374
  %v451 = vpop.f32.mrb[0].mxu0
  %v452 = vadd.f32 0.0, %v451
  %v453 = vpop.f32.mrb[0].mxu0
  %454 = vmatprep.mubr.f32.mxu0 0.0
  %455 = vmatmul.mubr.f32.gmra.mrb[0].mxu0 %v377
  %v456 = vpop.f32.mrb[0].mxu0
  %v457 = vadd.f32 0.0, %v456
  %v458 = vpop.f32.mrb[0].mxu0
  %459 = vmatprep.mubr.f32.mxu0 0.0
  %460 = vmatmul.mubr.f32.gmra.mrb[0].mxu0 %v380
  %v461 = vpop.f32.mrb[0].mxu0
  %v462 = vadd.f32 0.0, %v461
  %v463 = vpop.f32.mrb[0].mxu0
  %464 = vmatprep.mubr.f32.mxu0 0.0
  %465 = vmatmul.mubr.f32.gmra.mrb[0].mxu0 %v383
  %v466 = vpop.f32.mrb[0].mxu0
  %v467 = vadd.f32 0.0, %v466
  %v468 = vpop.f32.mrb[0].mxu0
  %469 = vdwg.mxu0
  %v470 = vadd.f32 %v355, %v452
  %v471 = vadd.f32 %v360, %v457
  %v472 = vadd.f32 %v365, %v462
  %v473 = vadd.f32 %v370, %v467
  %v474 = vld [vmem:[%s4] sm:$0x1]
  %v476 = vlaneseq
  %v477 = vshrl.u32 %v476, 7
  %v478 = vsub.s32 0, %v477
  %v479 = vrot.slane %v474, %v478
  %v481 = vadd.f32 %v470, %v479
  %v482 = vadd.f32 %v471, %v479
  %v483 = vadd.f32 %v472, %v479
  %v484 = vadd.f32 %v473, %v479
  %v485 = vmax.f32 %v481, 0.0
  %v486 = vmax.f32 %v482, 0.0
  %v487 = vmax.f32 %v483, 0.0
  %v488 = vmax.f32 %v484, 0.0
  %v489 = vld [vmem:[%s2] sm:$0xff]
  %v490 = vld [vmem:[%s2 + $0x8] sm:$0xff]
  %v491 = vld [vmem:[%s2 + $0x10] sm:$0xff]
  %v492 = vld [vmem:[%s2 + $0x18] sm:$0xff]
  %v493 = vld [vmem:[%s2 + $0x20] sm:$0xff]
  %v494 = vld [vmem:[%s2 + $0x28] sm:$0xff]
  %v495 = vld [vmem:[%s2 + $0x30] sm:$0xff]
  %v496 = vld [vmem:[%s2 + $0x38] sm:$0xff]
  %v497 = vld [vmem:[%s2 + $0x40] sm:$0xff]
  %v498 = vld [vmem:[%s2 + $0x48] sm:$0xff]
  %v499 = vld [vmem:[%s2 + $0x50] sm:$0xff]
  %v500 = vld [vmem:[%s2 + $0x58] sm:$0xff]
  %v501 = vld [vmem:[%s2 + $0x60] sm:$0xff]
  %v502 = vld [vmem:[%s2 + $0x68] sm:$0xff]
  %v503 = vld [vmem:[%s2 + $0x70] sm:$0xff]
  %v504 = vld [vmem:[%s2 + $0x78] sm:$0xff]
  %v505 = vld [vmem:[%s2 + $0x80] sm:$0xff]
  %v506 = vld [vmem:[%s2 + $0x88] sm:$0xff]
  %v507 = vld [vmem:[%s2 + $0x90] sm:$0xff]
  %v508 = vld [vmem:[%s2 + $0x98] sm:$0xff]
  %v509 = vld [vmem:[%s2 + $0xa0] sm:$0xff]
  %v510 = vld [vmem:[%s2 + $0xa8] sm:$0xff]
  %v511 = vld [vmem:[%s2 + $0xb0] sm:$0xff]
  %v512 = vld [vmem:[%s2 + $0xb8] sm:$0xff]
  %v513 = vld [vmem:[%s2 + $0xc0] sm:$0xff]
  %v514 = vld [vmem:[%s2 + $0xc8] sm:$0xff]
  %v515 = vld [vmem:[%s2 + $0xd0] sm:$0xff]
  %v516 = vld [vmem:[%s2 + $0xd8] sm:$0xff]
  %v517 = vld [vmem:[%s2 + $0xe0] sm:$0xff]
  %v518 = vld [vmem:[%s2 + $0xe8] sm:$0xff]
  %v519 = vld [vmem:[%s2 + $0xf0] sm:$0xff]
  %v520 = vld [vmem:[%s2 + $0xf8] sm:$0xff]
  %v521 = vld [vmem:[%s2 + $0x100] sm:$0xff]
  %v522 = vld [vmem:[%s2 + $0x108] sm:$0xff]
  %v523 = vld [vmem:[%s2 + $0x110] sm:$0xff]
  %v524 = vld [vmem:[%s2 + $0x118] sm:$0xff]
  %v525 = vld [vmem:[%s2 + $0x120] sm:$0xff]
  %v526 = vld [vmem:[%s2 + $0x128] sm:$0xff]
  %v527 = vld [vmem:[%s2 + $0x130] sm:$0xff]
  %v528 = vld [vmem:[%s2 + $0x138] sm:$0xff]
  %v529 = vld [vmem:[%s2 + $0x140] sm:$0xff]
  %v530 = vld [vmem:[%s2 + $0x148] sm:$0xff]
  %v531 = vld [vmem:[%s2 + $0x150] sm:$0xff]
  %v532 = vld [vmem:[%s2 + $0x158] sm:$0xff]
  %v533 = vld [vmem:[%s2 + $0x160] sm:$0xff]
  %v534 = vld [vmem:[%s2 + $0x168] sm:$0xff]
  %v535 = vld [vmem:[%s2 + $0x170] sm:$0xff]
  %v536 = vld [vmem:[%s2 + $0x178] sm:$0xff]
  %537 = vmatprep.subr.mxu0 %v490
  %538 = vmatpush1.msra.mxu0 %v489
  %539 = vmatprep.subr.mxu0 %v493
  %540 = vmatpush1.msra.mxu0 %v492
  %541 = vmatprep.subr.mxu0 %v496
  %542 = vmatpush1.msra.mxu0 %v495
  %543 = vmatprep.subr.mxu0 %v499
  %544 = vmatpush1.msra.mxu0 %v498
  %545 = vmatprep.subr.mxu0 %v502
  %546 = vmatpush1.msra.mxu0 %v501
  %547 = vmatprep.subr.mxu0 %v505
  %548 = vmatpush1.msra.mxu0 %v504
  %549 = vmatprep.subr.mxu0 %v508
  %550 = vmatpush1.msra.mxu0 %v507
  %551 = vmatprep.subr.mxu0 %v511
  %552 = vmatpush1.msra.mxu0 %v510
  %553 = vmatprep.subr.mxu0 %v514
  %554 = vmatpush1.msra.mxu0 %v513
  %555 = vmatprep.subr.mxu0 %v517
  %556 = vmatpush1.msra.mxu0 %v516
  %557 = vmatprep.subr.mxu0 %v520
  %558 = vmatpush1.msra.mxu0 %v519
  %559 = vmatprep.subr.mxu0 %v523
  %560 = vmatpush1.msra.mxu0 %v522
  %561 = vmatprep.subr.mxu0 %v526
  %562 = vmatpush1.msra.mxu0 %v525
  %563 = vmatprep.subr.mxu0 %v529
  %564 = vmatpush1.msra.mxu0 %v528
  %565 = vmatprep.subr.mxu0 %v532
  %566 = vmatpush1.msra.mxu0 %v531
  %567 = vmatprep.subr.mxu0 %v535
  %568 = vmatpush1.msra.mxu0 %v534
  %569 = vmatprep.subr.mxu0 0.0
  %570 = vmatpush1.msra.mxu0 0.0
  %571 = vmatprep.subr.mxu0 0.0
  %572 = vmatpush1.msra.mxu0 0.0
  %573 = vmatprep.subr.mxu0 0.0
  %574 = vmatpush1.msra.mxu0 0.0
  %575 = vmatprep.subr.mxu0 0.0
  %576 = vmatpush1.msra.mxu0 0.0
  %577 = vmatprep.subr.mxu0 0.0
  %578 = vmatpush1.msra.mxu0 0.0
  %579 = vmatprep.subr.mxu0 0.0
  %580 = vmatpush1.msra.mxu0 0.0
  %581 = vmatprep.subr.mxu0 0.0
  %582 = vmatpush1.msra.mxu0 0.0
  %583 = vmatprep.subr.mxu0 0.0
  %584 = vmatpush1.msra.mxu0 0.0
  %585 = vmatprep.subr.mxu0 0.0
  %586 = vmatpush1.msra.mxu0 0.0
  %587 = vmatprep.subr.mxu0 0.0
  %588 = vmatpush1.msra.mxu0 0.0
  %589 = vmatprep.subr.mxu0 0.0
  %590 = vmatpush1.msra.mxu0 0.0
  %591 = vmatprep.subr.mxu0 0.0
  %592 = vmatpush1.msra.mxu0 0.0
  %593 = vmatprep.subr.mxu0 0.0
  %594 = vmatpush1.msra.mxu0 0.0
  %595 = vmatprep.subr.mxu0 0.0
  %596 = vmatpush1.msra.mxu0 0.0
  %597 = vmatprep.subr.mxu0 0.0
  %598 = vmatpush1.msra.mxu0 0.0
  %599 = vmatprep.subr.mxu0 0.0
  %600 = vmatpush1.msra.mxu0 0.0
  %601 = vmatprep.mubr.f32.mxu0 0.0
  %602 = vmatmul.mubr.f32.gmra.mrb[0].mxu0 %v485
  %v603 = vpop.f32.mrb[0].mxu0
  %v604 = vadd.f32 0.0, %v603
  %v605 = vpop.f32.mrb[0].mxu0
  %v606 = vadd.f32 0.0, %v605
  %607 = vmatprep.mubr.f32.mxu0 0.0
  %608 = vmatmul.mubr.f32.gmra.mrb[0].mxu0 %v486
  %v609 = vpop.f32.mrb[0].mxu0
  %v610 = vadd.f32 0.0, %v609
  %v611 = vpop.f32.mrb[0].mxu0
  %v612 = vadd.f32 0.0, %v611
  %613 = vmatprep.mubr.f32.mxu0 0.0
  %614 = vmatmul.mubr.f32.gmra.mrb[0].mxu0 %v487
  %v615 = vpop.f32.mrb[0].mxu0
  %v616 = vadd.f32 0.0, %v615
  %v617 = vpop.f32.mrb[0].mxu0
  %v618 = vadd.f32 0.0, %v617
  %619 = vmatprep.mubr.f32.mxu0 0.0
  %620 = vmatmul.mubr.f32.gmra.mrb[0].mxu0 %v488
  %v621 = vpop.f32.mrb[0].mxu0
  %v622 = vadd.f32 0.0, %v621
  %v623 = vpop.f32.mrb[0].mxu0
  %v624 = vadd.f32 0.0, %v623
  %625 = vdwg.mxu0
  %626 = vmatprep.subr.mxu0 0.0
  %627 = vmatpush1.msra.mxu0 %v491
  %628 = vmatprep.subr.mxu0 0.0
  %629 = vmatpush1.msra.mxu0 %v494
  %630 = vmatprep.subr.mxu0 0.0
  %631 = vmatpush1.msra.mxu0 %v497
  %632 = vmatprep.subr.mxu0 0.0
  %633 = vmatpush1.msra.mxu0 %v500
  %634 = vmatprep.subr.mxu0 0.0
  %635 = vmatpush1.msra.mxu0 %v503
  %636 = vmatprep.subr.mxu0 0.0
  %637 = vmatpush1.msra.mxu0 %v506
  %638 = vmatprep.subr.mxu0 0.0
  %639 = vmatpush1.msra.mxu0 %v509
  %640 = vmatprep.subr.mxu0 0.0
  %641 = vmatpush1.msra.mxu0 %v512
  %642 = vmatprep.subr.mxu0 0.0
  %643 = vmatpush1.msra.mxu0 %v515
  %644 = vmatprep.subr.mxu0 0.0
  %645 = vmatpush1.msra.mxu0 %v518
  %646 = vmatprep.subr.mxu0 0.0
  %647 = vmatpush1.msra.mxu0 %v521
  %648 = vmatprep.subr.mxu0 0.0
  %649 = vmatpush1.msra.mxu0 %v524
  %650 = vmatprep.subr.mxu0 0.0
  %651 = vmatpush1.msra.mxu0 %v527
  %652 = vmatprep.subr.mxu0 0.0
  %653 = vmatpush1.msra.mxu0 %v530
  %654 = vmatprep.subr.mxu0 0.0
  %655 = vmatpush1.msra.mxu0 %v533
  %656 = vmatprep.subr.mxu0 0.0
  %657 = vmatpush1.msra.mxu0 %v536
  %658 = vmatprep.subr.mxu0 0.0
  %659 = vmatpush1.msra.mxu0 0.0
  %660 = vmatprep.subr.mxu0 0.0
  %661 = vmatpush1.msra.mxu0 0.0
  %662 = vmatprep.subr.mxu0 0.0
  %663 = vmatpush1.msra.mxu0 0.0
  %664 = vmatprep.subr.mxu0 0.0
  %665 = vmatpush1.msra.mxu0 0.0
  %666 = vmatprep.subr.mxu0 0.0
  %667 = vmatpush1.msra.mxu0 0.0
  %668 = vmatprep.subr.mxu0 0.0
  %669 = vmatpush1.msra.mxu0 0.0
  %670 = vmatprep.subr.mxu0 0.0
  %671 = vmatpush1.msra.mxu0 0.0
  %672 = vmatprep.subr.mxu0 0.0
  %673 = vmatpush1.msra.mxu0 0.0
  %674 = vmatprep.subr.mxu0 0.0
  %675 = vmatpush1.msra.mxu0 0.0
  %676 = vmatprep.subr.mxu0 0.0
  %677 = vmatpush1.msra.mxu0 0.0
  %678 = vmatprep.subr.mxu0 0.0
  %679 = vmatpush1.msra.mxu0 0.0
  %680 = vmatprep.subr.mxu0 0.0
  %681 = vmatpush1.msra.mxu0 0.0
  %682 = vmatprep.subr.mxu0 0.0
  %683 = vmatpush1.msra.mxu0 0.0
  %684 = vmatprep.subr.mxu0 0.0
  %685 = vmatpush1.msra.mxu0 0.0
  %686 = vmatprep.subr.mxu0 0.0
  %687 = vmatpush1.msra.mxu0 0.0
  %688 = vmatprep.subr.mxu0 0.0
  %689 = vmatpush1.msra.mxu0 0.0
  %690 = vmatprep.mubr.f32.mxu0 0.0
  %691 = vmatmul.mubr.f32.gmra.mrb[0].mxu0 %v485
  %v692 = vpop.f32.mrb[0].mxu0
  %v693 = vadd.f32 0.0, %v692
  %v694 = vpop.f32.mrb[0].mxu0
  %695 = vmatprep.mubr.f32.mxu0 0.0
  %696 = vmatmul.mubr.f32.gmra.mrb[0].mxu0 %v486
  %v697 = vpop.f32.mrb[0].mxu0
  %v698 = vadd.f32 0.0, %v697
  %v699 = vpop.f32.mrb[0].mxu0
  %700 = vmatprep.mubr.f32.mxu0 0.0
  %701 = vmatmul.mubr.f32.gmra.mrb[0].mxu0 %v487
  %v702 = vpop.f32.mrb[0].mxu0
  %v703 = vadd.f32 0.0, %v702
  %v704 = vpop.f32.mrb[0].mxu0
  %705 = vmatprep.mubr.f32.mxu0 0.0
  %706 = vmatmul.mubr.f32.gmra.mrb[0].mxu0 %v488
  %v707 = vpop.f32.mrb[0].mxu0
  %v708 = vadd.f32 0.0, %v707
  %v709 = vpop.f32.mrb[0].mxu0
  %710 = vdwg.mxu0
  %711 = vmatprep.subr.mxu0 0.0
  %712 = vmatpush1.msra.mxu0 %v604
  %713 = vmatprep.subr.mxu0 0.0
  %714 = vmatpush1.msra.mxu0 %v610
  %715 = vmatprep.subr.mxu0 0.0
  %716 = vmatpush1.msra.mxu0 %v616
  %717 = vmatprep.subr.mxu0 0.0
  %718 = vmatpush1.msra.mxu0 %v622
  %719 = vmatprep.subr.mxu0 0.0
  %720 = vmatpush1.msra.mxu0 0.0
  %721 = vmatprep.subr.mxu0 0.0
  %722 = vmatpush1.msra.mxu0 0.0
  %723 = vmatprep.subr.mxu0 0.0
  %724 = vmatpush1.msra.mxu0 0.0
  %725 = vmatprep.subr.mxu0 0.0
  %726 = vmatpush1.msra.mxu0 0.0
  %727 = vmatprep.subr.mxu0 0.0
  %728 = vmatpush1.msra.mxu0 0.0
  %729 = vmatprep.subr.mxu0 0.0
  %730 = vmatpush1.msra.mxu0 0.0
  %731 = vmatprep.subr.mxu0 0.0
  %732 = vmatpush1.msra.mxu0 0.0
  %733 = vmatprep.subr.mxu0 0.0
  %734 = vmatpush1.msra.mxu0 0.0
  %735 = vmatprep.subr.mxu0 0.0
  %736 = vmatpush1.msra.mxu0 0.0
  %737 = vmatprep.subr.mxu0 0.0
  %738 = vmatpush1.msra.mxu0 0.0
  %739 = vmatprep.subr.mxu0 0.0
  %740 = vmatpush1.msra.mxu0 0.0
  %741 = vmatprep.subr.mxu0 0.0
  %742 = vmatpush1.msra.mxu0 0.0
  %743 = vmatprep.subr.mxu0 0.0
  %744 = vmatpush1.msra.mxu0 0.0
  %745 = vmatprep.subr.mxu0 0.0
  %746 = vmatpush1.msra.mxu0 0.0
  %747 = vmatprep.subr.mxu0 0.0
  %748 = vmatpush1.msra.mxu0 0.0
  %749 = vmatprep.subr.mxu0 0.0
  %750 = vmatpush1.msra.mxu0 0.0
  %751 = vmatprep.subr.mxu0 0.0
  %752 = vmatpush1.msra.mxu0 0.0
  %753 = vmatprep.subr.mxu0 0.0
  %754 = vmatpush1.msra.mxu0 0.0
  %755 = vmatprep.subr.mxu0 0.0
  %756 = vmatpush1.msra.mxu0 0.0
  %757 = vmatprep.subr.mxu0 0.0
  %758 = vmatpush1.msra.mxu0 0.0
  %759 = vmatprep.subr.mxu0 0.0
  %760 = vmatpush1.msra.mxu0 0.0
  %761 = vmatprep.subr.mxu0 0.0
  %762 = vmatpush1.msra.mxu0 0.0
  %763 = vmatprep.subr.mxu0 0.0
  %764 = vmatpush1.msra.mxu0 0.0
  %765 = vmatprep.subr.mxu0 0.0
  %766 = vmatpush1.msra.mxu0 0.0
  %767 = vmatprep.subr.mxu0 0.0
  %768 = vmatpush1.msra.mxu0 0.0
  %769 = vmatprep.subr.mxu0 0.0
  %770 = vmatpush1.msra.mxu0 0.0
  %771 = vmatprep.subr.mxu0 0.0
  %772 = vmatpush1.msra.mxu0 0.0
  %773 = vmatprep.subr.mxu0 0.0
  %774 = vmatpush1.msra.mxu0 0.0
  %775 = vmatprep.mubr.f32.mxu0 0.0
  %776 = vmatmul.mubr.f32.gmra.mrb[0].mxu0 %v277
  %v777 = vpop.f32.mrb[0].mxu0
  %v778 = vadd.f32 %v606, %v777
  %v779 = vpop.f32.mrb[0].mxu0
  %780 = vmatprep.mubr.f32.mxu0 0.0
  %781 = vmatmul.mubr.f32.gmra.mrb[0].mxu0 %v280
  %v782 = vpop.f32.mrb[0].mxu0
  %v783 = vadd.f32 %v612, %v782
  %v784 = vpop.f32.mrb[0].mxu0
  %785 = vmatprep.mubr.f32.mxu0 0.0
  %786 = vmatmul.mubr.f32.gmra.mrb[0].mxu0 %v283
  %v787 = vpop.f32.mrb[0].mxu0
  %v788 = vadd.f32 %v618, %v787
  %v789 = vpop.f32.mrb[0].mxu0
  %790 = vmatprep.mubr.f32.mxu0 0.0
  %791 = vmatmul.mubr.f32.gmra.mrb[0].mxu0 %v286
  %v792 = vpop.f32.mrb[0].mxu0
  %v793 = vadd.f32 %v624, %v792
  %v794 = vpop.f32.mrb[0].mxu0
  %795 = vdwg.mxu0
  %796 = vmatprep.subr.mxu0 0.0
  %797 = vmatpush1.msra.mxu0 %v693
  %798 = vmatprep.subr.mxu0 0.0
  %799 = vmatpush1.msra.mxu0 %v698
  %800 = vmatprep.subr.mxu0 0.0
  %801 = vmatpush1.msra.mxu0 %v703
  %802 = vmatprep.subr.mxu0 0.0
  %803 = vmatpush1.msra.mxu0 %v708
  %804 = vmatprep.subr.mxu0 0.0
  %805 = vmatpush1.msra.mxu0 0.0
  %806 = vmatprep.subr.mxu0 0.0
  %807 = vmatpush1.msra.mxu0 0.0
  %808 = vmatprep.subr.mxu0 0.0
  %809 = vmatpush1.msra.mxu0 0.0
  %810 = vmatprep.subr.mxu0 0.0
  %811 = vmatpush1.msra.mxu0 0.0
  %812 = vmatprep.subr.mxu0 0.0
  %813 = vmatpush1.msra.mxu0 0.0
  %814 = vmatprep.subr.mxu0 0.0
  %815 = vmatpush1.msra.mxu0 0.0
  %816 = vmatprep.subr.mxu0 0.0
  %817 = vmatpush1.msra.mxu0 0.0
  %818 = vmatprep.subr.mxu0 0.0
  %819 = vmatpush1.msra.mxu0 0.0
  %820 = vmatprep.subr.mxu0 0.0
  %821 = vmatpush1.msra.mxu0 0.0
  %822 = vmatprep.subr.mxu0 0.0
  %823 = vmatpush1.msra.mxu0 0.0
  %824 = vmatprep.subr.mxu0 0.0
  %825 = vmatpush1.msra.mxu0 0.0
  %826 = vmatprep.subr.mxu0 0.0
  %827 = vmatpush1.msra.mxu0 0.0
  %828 = vmatprep.subr.mxu0 0.0
  %829 = vmatpush1.msra.mxu0 0.0
  %830 = vmatprep.subr.mxu0 0.0
  %831 = vmatpush1.msra.mxu0 0.0
  %832 = vmatprep.subr.mxu0 0.0
  %833 = vmatpush1.msra.mxu0 0.0
  %834 = vmatprep.subr.mxu0 0.0
  %835 = vmatpush1.msra.mxu0 0.0
  %836 = vmatprep.subr.mxu0 0.0
  %837 = vmatpush1.msra.mxu0 0.0
  %838 = vmatprep.subr.mxu0 0.0
  %839 = vmatpush1.msra.mxu0 0.0
  %840 = vmatprep.subr.mxu0 0.0
  %841 = vmatpush1.msra.mxu0 0.0
  %842 = vmatprep.subr.mxu0 0.0
  %843 = vmatpush1.msra.mxu0 0.0
  %844 = vmatprep.subr.mxu0 0.0
  %845 = vmatpush1.msra.mxu0 0.0
  %846 = vmatprep.subr.mxu0 0.0
  %847 = vmatpush1.msra.mxu0 0.0
  %848 = vmatprep.subr.mxu0 0.0
  %849 = vmatpush1.msra.mxu0 0.0
  %850 = vmatprep.subr.mxu0 0.0
  %851 = vmatpush1.msra.mxu0 0.0
  %852 = vmatprep.subr.mxu0 0.0
  %853 = vmatpush1.msra.mxu0 0.0
  %854 = vmatprep.subr.mxu0 0.0
  %855 = vmatpush1.msra.mxu0 0.0
  %856 = vmatprep.subr.mxu0 0.0
  %857 = vmatpush1.msra.mxu0 0.0
  %858 = vmatprep.subr.mxu0 0.0
  %859 = vmatpush1.msra.mxu0 0.0
  %860 = vmatprep.mubr.f32.mxu0 0.0
  %861 = vmatmul.mubr.f32.gmra.mrb[0].mxu0 %v374
  %v862 = vpop.f32.mrb[0].mxu0
  %v863 = vadd.f32 0.0, %v862
  %v864 = vpop.f32.mrb[0].mxu0
  %865 = vmatprep.mubr.f32.mxu0 0.0
  %866 = vmatmul.mubr.f32.gmra.mrb[0].mxu0 %v377
  %v867 = vpop.f32.mrb[0].mxu0
  %v868 = vadd.f32 0.0, %v867
  %v869 = vpop.f32.mrb[0].mxu0
  %870 = vmatprep.mubr.f32.mxu0 0.0
  %871 = vmatmul.mubr.f32.gmra.mrb[0].mxu0 %v380
  %v872 = vpop.f32.mrb[0].mxu0
  %v873 = vadd.f32 0.0, %v872
  %v874 = vpop.f32.mrb[0].mxu0
  %875 = vmatprep.mubr.f32.mxu0 0.0
  %876 = vmatmul.mubr.f32.gmra.mrb[0].mxu0 %v383
  %v877 = vpop.f32.mrb[0].mxu0
  %v878 = vadd.f32 0.0, %v877
  %v879 = vpop.f32.mrb[0].mxu0
  %880 = vdwg.mxu0
  %v881 = vadd.f32 %v778, %v863
  %v882 = vadd.f32 %v783, %v868
  %v883 = vadd.f32 %v788, %v873
  %v884 = vadd.f32 %v793, %v878
  %v885 = vmax.f32 %v881, 0.0
  %v886 = vmax.f32 %v882, 0.0
  %v887 = vmax.f32 %v883, 0.0
  %v888 = vmax.f32 %v884, 0.0
  %v889 = vld [vmem:[%s3] sm:$0xff]
  %v890 = vld [vmem:[%s3 + $0x8] sm:$0xff]
  %v891 = vld [vmem:[%s3 + $0x10] sm:$0xff]
  %v892 = vld [vmem:[%s3 + $0x18] sm:$0xff]
  %v893 = vld [vmem:[%s3 + $0x20] sm:$0xff]
  %v894 = vld [vmem:[%s3 + $0x28] sm:$0xff]
  %v895 = vld [vmem:[%s3 + $0x30] sm:$0xff]
  %v896 = vld [vmem:[%s3 + $0x38] sm:$0xff]
  %v897 = vld [vmem:[%s3 + $0x40] sm:$0xff]
  %v898 = vld [vmem:[%s3 + $0x48] sm:$0xff]
  %v899 = vld [vmem:[%s3 + $0x50] sm:$0xff]
  %v900 = vld [vmem:[%s3 + $0x58] sm:$0xff]
  %v901 = vld [vmem:[%s3 + $0x60] sm:$0xff]
  %v902 = vld [vmem:[%s3 + $0x68] sm:$0xff]
  %v903 = vld [vmem:[%s3 + $0x70] sm:$0xff]
  %v904 = vld [vmem:[%s3 + $0x78] sm:$0xff]
  %v905 = vld [vmem:[%s3 + $0x80] sm:$0xff]
  %v906 = vld [vmem:[%s3 + $0x88] sm:$0xff]
  %v907 = vld [vmem:[%s3 + $0x90] sm:$0xff]
  %v908 = vld [vmem:[%s3 + $0x98] sm:$0xff]
  %v909 = vld [vmem:[%s3 + $0xa0] sm:$0xff]
  %v910 = vld [vmem:[%s3 + $0xa8] sm:$0xff]
  %v911 = vld [vmem:[%s3 + $0xb0] sm:$0xff]
  %v912 = vld [vmem:[%s3 + $0xb8] sm:$0xff]
  %v913 = vld [vmem:[%s3 + $0xc0] sm:$0xff]
  %v914 = vld [vmem:[%s3 + $0xc8] sm:$0xff]
  %v915 = vld [vmem:[%s3 + $0xd0] sm:$0xff]
  %v916 = vld [vmem:[%s3 + $0xd8] sm:$0xff]
  %v917 = vld [vmem:[%s3 + $0xe0] sm:$0xff]
  %v918 = vld [vmem:[%s3 + $0xe8] sm:$0xff]
  %v919 = vld [vmem:[%s3 + $0xf0] sm:$0xff]
  %v920 = vld [vmem:[%s3 + $0xf8] sm:$0xff]
  %v921 = vld [vmem:[%s3 + $0x100] sm:$0xff]
  %v922 = vld [vmem:[%s3 + $0x108] sm:$0xff]
  %v923 = vld [vmem:[%s3 + $0x110] sm:$0xff]
  %v924 = vld [vmem:[%s3 + $0x118] sm:$0xff]
  %v925 = vld [vmem:[%s3 + $0x120] sm:$0xff]
  %v926 = vld [vmem:[%s3 + $0x128] sm:$0xff]
  %v927 = vld [vmem:[%s3 + $0x130] sm:$0xff]
  %v928 = vld [vmem:[%s3 + $0x138] sm:$0xff]
  %v929 = vld [vmem:[%s3 + $0x140] sm:$0xff]
  %v930 = vld [vmem:[%s3 + $0x148] sm:$0xff]
  %v931 = vld [vmem:[%s3 + $0x150] sm:$0xff]
  %v932 = vld [vmem:[%s3 + $0x158] sm:$0xff]
  %v933 = vld [vmem:[%s3 + $0x160] sm:$0xff]
  %v934 = vld [vmem:[%s3 + $0x168] sm:$0xff]
  %v935 = vld [vmem:[%s3 + $0x170] sm:$0xff]
  %v936 = vld [vmem:[%s3 + $0x178] sm:$0xff]
  %937 = vmatprep.subr.mxu0 %v890
  %938 = vmatpush1.msra.mxu0 %v889
  %939 = vmatprep.subr.mxu0 %v893
  %940 = vmatpush1.msra.mxu0 %v892
  %941 = vmatprep.subr.mxu0 %v896
  %942 = vmatpush1.msra.mxu0 %v895
  %943 = vmatprep.subr.mxu0 %v899
  %944 = vmatpush1.msra.mxu0 %v898
  %945 = vmatprep.subr.mxu0 %v902
  %946 = vmatpush1.msra.mxu0 %v901
  %947 = vmatprep.subr.mxu0 %v905
  %948 = vmatpush1.msra.mxu0 %v904
  %949 = vmatprep.subr.mxu0 %v908
  %950 = vmatpush1.msra.mxu0 %v907
  %951 = vmatprep.subr.mxu0 %v911
  %952 = vmatpush1.msra.mxu0 %v910
  %953 = vmatprep.subr.mxu0 %v914
  %954 = vmatpush1.msra.mxu0 %v913
  %955 = vmatprep.subr.mxu0 %v917
  %956 = vmatpush1.msra.mxu0 %v916
  %957 = vmatprep.subr.mxu0 %v920
  %958 = vmatpush1.msra.mxu0 %v919
  %959 = vmatprep.subr.mxu0 %v923
  %960 = vmatpush1.msra.mxu0 %v922
  %961 = vmatprep.subr.mxu0 %v926
  %962 = vmatpush1.msra.mxu0 %v925
  %963 = vmatprep.subr.mxu0 %v929
  %964 = vmatpush1.msra.mxu0 %v928
  %965 = vmatprep.subr.mxu0 %v932
  %966 = vmatpush1.msra.mxu0 %v931
  %967 = vmatprep.subr.mxu0 %v935
  %968 = vmatpush1.msra.mxu0 %v934
  %969 = vmatprep.subr.mxu0 0.0
  %970 = vmatpush1.msra.mxu0 0.0
  %971 = vmatprep.subr.mxu0 0.0
  %972 = vmatpush1.msra.mxu0 0.0
  %973 = vmatprep.subr.mxu0 0.0
  %974 = vmatpush1.msra.mxu0 0.0
  %975 = vmatprep.subr.mxu0 0.0
  %976 = vmatpush1.msra.mxu0 0.0
  %977 = vmatprep.subr.mxu0 0.0
  %978 = vmatpush1.msra.mxu0 0.0
  %979 = vmatprep.subr.mxu0 0.0
  %980 = vmatpush1.msra.mxu0 0.0
  %981 = vmatprep.subr.mxu0 0.0
  %982 = vmatpush1.msra.mxu0 0.0
  %983 = vmatprep.subr.mxu0 0.0
  %984 = vmatpush1.msra.mxu0 0.0
  %985 = vmatprep.subr.mxu0 0.0
  %986 = vmatpush1.msra.mxu0 0.0
  %987 = vmatprep.subr.mxu0 0.0
  %988 = vmatpush1.msra.mxu0 0.0
  %989 = vmatprep.subr.mxu0 0.0
  %990 = vmatpush1.msra.mxu0 0.0
  %991 = vmatprep.subr.mxu0 0.0
  %992 = vmatpush1.msra.mxu0 0.0
  %993 = vmatprep.subr.mxu0 0.0
  %994 = vmatpush1.msra.mxu0 0.0
  %995 = vmatprep.subr.mxu0 0.0
  %996 = vmatpush1.msra.mxu0 0.0
  %997 = vmatprep.subr.mxu0 0.0
  %998 = vmatpush1.msra.mxu0 0.0
  %999 = vmatprep.subr.mxu0 0.0
  %1000 = vmatpush1.msra.mxu0 0.0
  %1001 = vmatprep.mubr.f32.mxu0 0.0
  %1002 = vmatmul.mubr.f32.gmra.mrb[0].mxu0 %v885
  %v1003 = vpop.f32.mrb[0].mxu0
  %v1004 = vadd.f32 0.0, %v1003
  %v1005 = vpop.f32.mrb[0].mxu0
  %v1006 = vadd.f32 0.0, %v1005
  %1007 = vmatprep.mubr.f32.mxu0 0.0
  %1008 = vmatmul.mubr.f32.gmra.mrb[0].mxu0 %v886
  %v1009 = vpop.f32.mrb[0].mxu0
  %v1010 = vadd.f32 0.0, %v1009
  %v1011 = vpop.f32.mrb[0].mxu0
  %v1012 = vadd.f32 0.0, %v1011
  %1013 = vmatprep.mubr.f32.mxu0 0.0
  %1014 = vmatmul.mubr.f32.gmra.mrb[0].mxu0 %v887
  %v1015 = vpop.f32.mrb[0].mxu0
  %v1016 = vadd.f32 0.0, %v1015
  %v1017 = vpop.f32.mrb[0].mxu0
  %v1018 = vadd.f32 0.0, %v1017
  %1019 = vmatprep.mubr.f32.mxu0 0.0
  %1020 = vmatmul.mubr.f32.gmra.mrb[0].mxu0 %v888
  %v1021 = vpop.f32.mrb[0].mxu0
  %v1022 = vadd.f32 0.0, %v1021
  %v1023 = vpop.f32.mrb[0].mxu0
  %v1024 = vadd.f32 0.0, %v1023
  %1025 = vdwg.mxu0
  %1026 = vmatprep.subr.mxu0 0.0
  %1027 = vmatpush1.msra.mxu0 %v891
  %1028 = vmatprep.subr.mxu0 0.0
  %1029 = vmatpush1.msra.mxu0 %v894
  %1030 = vmatprep.subr.mxu0 0.0
  %1031 = vmatpush1.msra.mxu0 %v897
  %1032 = vmatprep.subr.mxu0 0.0
  %1033 = vmatpush1.msra.mxu0 %v900
  %1034 = vmatprep.subr.mxu0 0.0
  %1035 = vmatpush1.msra.mxu0 %v903
  %1036 = vmatprep.subr.mxu0 0.0
  %1037 = vmatpush1.msra.mxu0 %v906
  %1038 = vmatprep.subr.mxu0 0.0
  %1039 = vmatpush1.msra.mxu0 %v909
  %1040 = vmatprep.subr.mxu0 0.0
  %1041 = vmatpush1.msra.mxu0 %v912
  %1042 = vmatprep.subr.mxu0 0.0
  %1043 = vmatpush1.msra.mxu0 %v915
  %1044 = vmatprep.subr.mxu0 0.0
  %1045 = vmatpush1.msra.mxu0 %v918
  %1046 = vmatprep.subr.mxu0 0.0
  %1047 = vmatpush1.msra.mxu0 %v921
  %1048 = vmatprep.subr.mxu0 0.0
  %1049 = vmatpush1.msra.mxu0 %v924
  %1050 = vmatprep.subr.mxu0 0.0
  %1051 = vmatpush1.msra.mxu0 %v927
  %1052 = vmatprep.subr.mxu0 0.0
  %1053 = vmatpush1.msra.mxu0 %v930
  %1054 = vmatprep.subr.mxu0 0.0
  %1055 = vmatpush1.msra.mxu0 %v933
  %1056 = vmatprep.subr.mxu0 0.0
  %1057 = vmatpush1.msra.mxu0 %v936
  %1058 = vmatprep.subr.mxu0 0.0
  %1059 = vmatpush1.msra.mxu0 0.0
  %1060 = vmatprep.subr.mxu0 0.0
  %1061 = vmatpush1.msra.mxu0 0.0
  %1062 = vmatprep.subr.mxu0 0.0
  %1063 = vmatpush1.msra.mxu0 0.0
  %1064 = vmatprep.subr.mxu0 0.0
  %1065 = vmatpush1.msra.mxu0 0.0
  %1066 = vmatprep.subr.mxu0 0.0
  %1067 = vmatpush1.msra.mxu0 0.0
  %1068 = vmatprep.subr.mxu0 0.0
  %1069 = vmatpush1.msra.mxu0 0.0
  %1070 = vmatprep.subr.mxu0 0.0
  %1071 = vmatpush1.msra.mxu0 0.0
  %1072 = vmatprep.subr.mxu0 0.0
  %1073 = vmatpush1.msra.mxu0 0.0
  %1074 = vmatprep.subr.mxu0 0.0
  %1075 = vmatpush1.msra.mxu0 0.0
  %1076 = vmatprep.subr.mxu0 0.0
  %1077 = vmatpush1.msra.mxu0 0.0
  %1078 = vmatprep.subr.mxu0 0.0
  %1079 = vmatpush1.msra.mxu0 0.0
  %1080 = vmatprep.subr.mxu0 0.0
  %1081 = vmatpush1.msra.mxu0 0.0
  %1082 = vmatprep.subr.mxu0 0.0
  %1083 = vmatpush1.msra.mxu0 0.0
  %1084 = vmatprep.subr.mxu0 0.0
  %1085 = vmatpush1.msra.mxu0 0.0
  %1086 = vmatprep.subr.mxu0 0.0
  %1087 = vmatpush1.msra.mxu0 0.0
  %1088 = vmatprep.subr.mxu0 0.0
  %1089 = vmatpush1.msra.mxu0 0.0
  %1090 = vmatprep.mubr.f32.mxu0 0.0
  %1091 = vmatmul.mubr.f32.gmra.mrb[0].mxu0 %v885
  %v1092 = vpop.f32.mrb[0].mxu0
  %v1093 = vadd.f32 0.0, %v1092
  %v1094 = vpop.f32.mrb[0].mxu0
  %1095 = vmatprep.mubr.f32.mxu0 0.0
  %1096 = vmatmul.mubr.f32.gmra.mrb[0].mxu0 %v886
  %v1097 = vpop.f32.mrb[0].mxu0
  %v1098 = vadd.f32 0.0, %v1097
  %v1099 = vpop.f32.mrb[0].mxu0
  %1100 = vmatprep.mubr.f32.mxu0 0.0
  %1101 = vmatmul.mubr.f32.gmra.mrb[0].mxu0 %v887
  %v1102 = vpop.f32.mrb[0].mxu0
  %v1103 = vadd.f32 0.0, %v1102
  %v1104 = vpop.f32.mrb[0].mxu0
  %1105 = vmatprep.mubr.f32.mxu0 0.0
  %1106 = vmatmul.mubr.f32.gmra.mrb[0].mxu0 %v888
  %v1107 = vpop.f32.mrb[0].mxu0
  %v1108 = vadd.f32 0.0, %v1107
  %v1109 = vpop.f32.mrb[0].mxu0
  %1110 = vdwg.mxu0
  %1111 = vmatprep.subr.mxu0 0.0
  %1112 = vmatpush1.msra.mxu0 %v1004
  %1113 = vmatprep.subr.mxu0 0.0
  %1114 = vmatpush1.msra.mxu0 %v1010
  %1115 = vmatprep.subr.mxu0 0.0
  %1116 = vmatpush1.msra.mxu0 %v1016
  %1117 = vmatprep.subr.mxu0 0.0
  %1118 = vmatpush1.msra.mxu0 %v1022
  %1119 = vmatprep.subr.mxu0 0.0
  %1120 = vmatpush1.msra.mxu0 0.0
  %1121 = vmatprep.subr.mxu0 0.0
  %1122 = vmatpush1.msra.mxu0 0.0
  %1123 = vmatprep.subr.mxu0 0.0
  %1124 = vmatpush1.msra.mxu0 0.0
  %1125 = vmatprep.subr.mxu0 0.0
  %1126 = vmatpush1.msra.mxu0 0.0
  %1127 = vmatprep.subr.mxu0 0.0
  %1128 = vmatpush1.msra.mxu0 0.0
  %1129 = vmatprep.subr.mxu0 0.0
  %1130 = vmatpush1.msra.mxu0 0.0
  %1131 = vmatprep.subr.mxu0 0.0
  %1132 = vmatpush1.msra.mxu0 0.0
  %1133 = vmatprep.subr.mxu0 0.0
  %1134 = vmatpush1.msra.mxu0 0.0
  %1135 = vmatprep.subr.mxu0 0.0
  %1136 = vmatpush1.msra.mxu0 0.0
  %1137 = vmatprep.subr.mxu0 0.0
  %1138 = vmatpush1.msra.mxu0 0.0
  %1139 = vmatprep.subr.mxu0 0.0
  %1140 = vmatpush1.msra.mxu0 0.0
  %1141 = vmatprep.subr.mxu0 0.0
  %1142 = vmatpush1.msra.mxu0 0.0
  %1143 = vmatprep.subr.mxu0 0.0
  %1144 = vmatpush1.msra.mxu0 0.0
  %1145 = vmatprep.subr.mxu0 0.0
  %1146 = vmatpush1.msra.mxu0 0.0
  %1147 = vmatprep.subr.mxu0 0.0
  %1148 = vmatpush1.msra.mxu0 0.0
  %1149 = vmatprep.subr.mxu0 0.0
  %1150 = vmatpush1.msra.mxu0 0.0
  %1151 = vmatprep.subr.mxu0 0.0
  %1152 = vmatpush1.msra.mxu0 0.0
  %1153 = vmatprep.subr.mxu0 0.0
  %1154 = vmatpush1.msra.mxu0 0.0
  %1155 = vmatprep.subr.mxu0 0.0
  %1156 = vmatpush1.msra.mxu0 0.0
  %1157 = vmatprep.subr.mxu0 0.0
  %1158 = vmatpush1.msra.mxu0 0.0
  %1159 = vmatprep.subr.mxu0 0.0
  %1160 = vmatpush1.msra.mxu0 0.0
  %1161 = vmatprep.subr.mxu0 0.0
  %1162 = vmatpush1.msra.mxu0 0.0
  %1163 = vmatprep.subr.mxu0 0.0
  %1164 = vmatpush1.msra.mxu0 0.0
  %1165 = vmatprep.subr.mxu0 0.0
  %1166 = vmatpush1.msra.mxu0 0.0
  %1167 = vmatprep.subr.mxu0 0.0
  %1168 = vmatpush1.msra.mxu0 0.0
  %1169 = vmatprep.subr.mxu0 0.0
  %1170 = vmatpush1.msra.mxu0 0.0
  %1171 = vmatprep.subr.mxu0 0.0
  %1172 = vmatpush1.msra.mxu0 0.0
  %1173 = vmatprep.subr.mxu0 0.0
  %1174 = vmatpush1.msra.mxu0 0.0
  %1175 = vmatprep.mubr.f32.mxu0 0.0
  %1176 = vmatmul.mubr.f32.gmra.mrb[0].mxu0 %v277
  %v1177 = vpop.f32.mrb[0].mxu0
  %v1178 = vadd.f32 %v1006, %v1177
  %v1179 = vpop.f32.mrb[0].mxu0
  %1180 = vmatprep.mubr.f32.mxu0 0.0
  %1181 = vmatmul.mubr.f32.gmra.mrb[0].mxu0 %v280
  %v1182 = vpop.f32.mrb[0].mxu0
  %v1183 = vadd.f32 %v1012, %v1182
  %v1184 = vpop.f32.mrb[0].mxu0
  %1185 = vmatprep.mubr.f32.mxu0 0.0
  %1186 = vmatmul.mubr.f32.gmra.mrb[0].mxu0 %v283
  %v1187 = vpop.f32.mrb[0].mxu0
  %v1188 = vadd.f32 %v1018, %v1187
  %v1189 = vpop.f32.mrb[0].mxu0
  %1190 = vmatprep.mubr.f32.mxu0 0.0
  %1191 = vmatmul.mubr.f32.gmra.mrb[0].mxu0 %v286
  %v1192 = vpop.f32.mrb[0].mxu0
  %v1193 = vadd.f32 %v1024, %v1192
  %v1194 = vpop.f32.mrb[0].mxu0
  %1195 = vdwg.mxu0
  %1196 = vmatprep.subr.mxu0 0.0
  %1197 = vmatpush1.msra.mxu0 %v1093
  %1198 = vmatprep.subr.mxu0 0.0
  %1199 = vmatpush1.msra.mxu0 %v1098
  %1200 = vmatprep.subr.mxu0 0.0
  %1201 = vmatpush1.msra.mxu0 %v1103
  %1202 = vmatprep.subr.mxu0 0.0
  %1203 = vmatpush1.msra.mxu0 %v1108
  %1204 = vmatprep.subr.mxu0 0.0
  %1205 = vmatpush1.msra.mxu0 0.0
  %1206 = vmatprep.subr.mxu0 0.0
  %1207 = vmatpush1.msra.mxu0 0.0
  %1208 = vmatprep.subr.mxu0 0.0
  %1209 = vmatpush1.msra.mxu0 0.0
  %1210 = vmatprep.subr.mxu0 0.0
  %1211 = vmatpush1.msra.mxu0 0.0
  %1212 = vmatprep.subr.mxu0 0.0
  %1213 = vmatpush1.msra.mxu0 0.0
  %1214 = vmatprep.subr.mxu0 0.0
  %1215 = vmatpush1.msra.mxu0 0.0
  %1216 = vmatprep.subr.mxu0 0.0
  %1217 = vmatpush1.msra.mxu0 0.0
  %1218 = vmatprep.subr.mxu0 0.0
  %1219 = vmatpush1.msra.mxu0 0.0
  %1220 = vmatprep.subr.mxu0 0.0
  %1221 = vmatpush1.msra.mxu0 0.0
  %1222 = vmatprep.subr.mxu0 0.0
  %1223 = vmatpush1.msra.mxu0 0.0
  %1224 = vmatprep.subr.mxu0 0.0
  %1225 = vmatpush1.msra.mxu0 0.0
  %1226 = vmatprep.subr.mxu0 0.0
  %1227 = vmatpush1.msra.mxu0 0.0
  %1228 = vmatprep.subr.mxu0 0.0
  %1229 = vmatpush1.msra.mxu0 0.0
  %1230 = vmatprep.subr.mxu0 0.0
  %1231 = vmatpush1.msra.mxu0 0.0
  %1232 = vmatprep.subr.mxu0 0.0
  %1233 = vmatpush1.msra.mxu0 0.0
  %1234 = vmatprep.subr.mxu0 0.0
  %1235 = vmatpush1.msra.mxu0 0.0
  %1236 = vmatprep.subr.mxu0 0.0
  %1237 = vmatpush1.msra.mxu0 0.0
  %1238 = vmatprep.subr.mxu0 0.0
  %1239 = vmatpush1.msra.mxu0 0.0
  %1240 = vmatprep.subr.mxu0 0.0
  %1241 = vmatpush1.msra.mxu0 0.0
  %1242 = vmatprep.subr.mxu0 0.0
  %1243 = vmatpush1.msra.mxu0 0.0
  %1244 = vmatprep.subr.mxu0 0.0
  %1245 = vmatpush1.msra.mxu0 0.0
  %1246 = vmatprep.subr.mxu0 0.0
  %1247 = vmatpush1.msra.mxu0 0.0
  %1248 = vmatprep.subr.mxu0 0.0
  %1249 = vmatpush1.msra.mxu0 0.0
  %1250 = vmatprep.subr.mxu0 0.0
  %1251 = vmatpush1.msra.mxu0 0.0
  %1252 = vmatprep.subr.mxu0 0.0
  %1253 = vmatpush1.msra.mxu0 0.0
  %1254 = vmatprep.subr.mxu0 0.0
  %1255 = vmatpush1.msra.mxu0 0.0
  %1256 = vmatprep.subr.mxu0 0.0
  %1257 = vmatpush1.msra.mxu0 0.0
  %1258 = vmatprep.subr.mxu0 0.0
  %1259 = vmatpush1.msra.mxu0 0.0
  %1260 = vmatprep.mubr.f32.mxu0 0.0
  %1261 = vmatmul.mubr.f32.gmra.mrb[0].mxu0 %v374
  %v1262 = vpop.f32.mrb[0].mxu0
  %v1263 = vadd.f32 0.0, %v1262
  %v1264 = vpop.f32.mrb[0].mxu0
  %1265 = vmatprep.mubr.f32.mxu0 0.0
  %1266 = vmatmul.mubr.f32.gmra.mrb[0].mxu0 %v377
  %v1267 = vpop.f32.mrb[0].mxu0
  %v1268 = vadd.f32 0.0, %v1267
  %v1269 = vpop.f32.mrb[0].mxu0
  %1270 = vmatprep.mubr.f32.mxu0 0.0
  %1271 = vmatmul.mubr.f32.gmra.mrb[0].mxu0 %v380
  %v1272 = vpop.f32.mrb[0].mxu0
  %v1273 = vadd.f32 0.0, %v1272
  %v1274 = vpop.f32.mrb[0].mxu0
  %1275 = vmatprep.mubr.f32.mxu0 0.0
  %1276 = vmatmul.mubr.f32.gmra.mrb[0].mxu0 %v383
  %v1277 = vpop.f32.mrb[0].mxu0
  %v1278 = vadd.f32 0.0, %v1277
  %v1279 = vpop.f32.mrb[0].mxu0
  %1280 = vdwg.mxu0
  %v1281 = vadd.f32 %v1178, %v1263
  %v1282 = vadd.f32 %v1183, %v1268
  %v1283 = vadd.f32 %v1188, %v1273
  %v1284 = vadd.f32 %v1193, %v1278
  %v1285 = vld [vmem:[%s5] sm:$0x1]
  %v1287 = vlaneseq
  %v1288 = vshrl.u32 %v1287, 7
  %v1289 = vsub.s32 0, %v1288
  %v1290 = vrot.slane %v1285, %v1289
  %v1292 = vadd.f32 %v1281, %v1290
  %v1293 = vadd.f32 %v1282, %v1290
  %v1294 = vadd.f32 %v1283, %v1290
  %v1295 = vadd.f32 %v1284, %v1290
  %v1296 = vmax.f32 %v1292, 0.0
  %v1297 = vmax.f32 %v1293, 0.0
  %v1298 = vmax.f32 %v1294, 0.0
  %v1299 = vmax.f32 %v1295, 0.0
  %v1300 = vld [vmem:[%s8] sm:$0xff]
  %v1301 = vld [vmem:[%s8 + $0x8] sm:$0xff]
  %v1302 = vld [vmem:[%s8 + $0x10] sm:$0xff]
  %v1303 = vld [vmem:[%s8 + $0x18] sm:$0xff]
  %v1304 = vld [vmem:[%s8 + $0x20] sm:$0xff]
  %v1305 = vld [vmem:[%s8 + $0x28] sm:$0xff]
  %v1306 = vld [vmem:[%s8 + $0x30] sm:$0xff]
  %v1307 = vld [vmem:[%s8 + $0x38] sm:$0xff]
  %v1308 = vld [vmem:[%s8 + $0x40] sm:$0xff]
  %v1309 = vld [vmem:[%s8 + $0x48] sm:$0xff]
  %v1310 = vld [vmem:[%s8 + $0x50] sm:$0xff]
  %v1311 = vld [vmem:[%s8 + $0x58] sm:$0xff]
  %v1312 = vld [vmem:[%s8 + $0x60] sm:$0xff]
  %v1313 = vld [vmem:[%s8 + $0x68] sm:$0xff]
  %v1314 = vld [vmem:[%s8 + $0x70] sm:$0xff]
  %v1315 = vld [vmem:[%s8 + $0x78] sm:$0xff]
  %v1316 = vadd.f32 %v1296, %v1297
  %v1317 = vadd.f32 %v1316, %v1298
  %v1318 = vadd.f32 %v1317, %v1299
  %v1319 = vrot.slane %v1318, 4
  %v1320 = vadd.f32 %v1318, %v1319
  %v1321 = vrot.slane %v1320, 2
  %v1322 = vadd.f32 %v1320, %v1321
  %v1323 = vrot.slane %v1322, 1
  %v1324 = vadd.f32 %v1322, %v1323
  %1325 = vmatprep.subr.mxu0 0.0
  %1326 = vmatpush1.msra.mxu0 %v1300
  %1327 = vmatprep.subr.mxu0 0.0
  %1328 = vmatpush1.msra.mxu0 %v1301
  %1329 = vmatprep.subr.mxu0 0.0
  %1330 = vmatpush1.msra.mxu0 %v1302
  %1331 = vmatprep.subr.mxu0 0.0
  %1332 = vmatpush1.msra.mxu0 %v1303
  %1333 = vmatprep.subr.mxu0 0.0
  %1334 = vmatpush1.msra.mxu0 %v1304
  %1335 = vmatprep.subr.mxu0 0.0
  %1336 = vmatpush1.msra.mxu0 %v1305
  %1337 = vmatprep.subr.mxu0 0.0
  %1338 = vmatpush1.msra.mxu0 %v1306
  %1339 = vmatprep.subr.mxu0 0.0
  %1340 = vmatpush1.msra.mxu0 %v1307
  %1341 = vmatprep.subr.mxu0 0.0
  %1342 = vmatpush1.msra.mxu0 %v1308
  %1343 = vmatprep.subr.mxu0 0.0
  %1344 = vmatpush1.msra.mxu0 %v1309
  %1345 = vmatprep.subr.mxu0 0.0
  %1346 = vmatpush1.msra.mxu0 %v1310
  %1347 = vmatprep.subr.mxu0 0.0
  %1348 = vmatpush1.msra.mxu0 %v1311
  %1349 = vmatprep.subr.mxu0 0.0
  %1350 = vmatpush1.msra.mxu0 %v1312
  %1351 = vmatprep.subr.mxu0 0.0
  %1352 = vmatpush1.msra.mxu0 %v1313
  %1353 = vmatprep.subr.mxu0 0.0
  %1354 = vmatpush1.msra.mxu0 %v1314
  %1355 = vmatprep.subr.mxu0 0.0
  %1356 = vmatpush1.msra.mxu0 %v1315
  %1357 = vmatprep.subr.mxu0 0.0
  %1358 = vmatpush1.msra.mxu0 0.0
  %1359 = vmatprep.subr.mxu0 0.0
  %1360 = vmatpush1.msra.mxu0 0.0
  %1361 = vmatprep.subr.mxu0 0.0
  %1362 = vmatpush1.msra.mxu0 0.0
  %1363 = vmatprep.subr.mxu0 0.0
  %1364 = vmatpush1.msra.mxu0 0.0
  %1365 = vmatprep.subr.mxu0 0.0
  %1366 = vmatpush1.msra.mxu0 0.0
  %1367 = vmatprep.subr.mxu0 0.0
  %1368 = vmatpush1.msra.mxu0 0.0
  %1369 = vmatprep.subr.mxu0 0.0
  %1370 = vmatpush1.msra.mxu0 0.0
  %1371 = vmatprep.subr.mxu0 0.0
  %1372 = vmatpush1.msra.mxu0 0.0
  %1373 = vmatprep.subr.mxu0 0.0
  %1374 = vmatpush1.msra.mxu0 0.0
  %1375 = vmatprep.subr.mxu0 0.0
  %1376 = vmatpush1.msra.mxu0 0.0
  %1377 = vmatprep.subr.mxu0 0.0
  %1378 = vmatpush1.msra.mxu0 0.0
  %1379 = vmatprep.subr.mxu0 0.0
  %1380 = vmatpush1.msra.mxu0 0.0
  %1381 = vmatprep.subr.mxu0 0.0
  %1382 = vmatpush1.msra.mxu0 0.0
  %1383 = vmatprep.subr.mxu0 0.0
  %1384 = vmatpush1.msra.mxu0 0.0
  %1385 = vmatprep.subr.mxu0 0.0
  %1386 = vmatpush1.msra.mxu0 0.0
  %1387 = vmatprep.subr.mxu0 0.0
  %1388 = vmatpush1.msra.mxu0 0.0
  %1389 = vmatprep.mubr.f32.mxu0 0.0
  %1390 = vmatmul.mubr.f32.gmra.mrb[0].mxu0 %v1324
  %v1391 = vpop.f32.mrb[0].mxu0
  %v1392 = vadd.f32 0.0, %v1391
  %v1393 = vpop.f32.mrb[0].mxu0
  %1394 = vdwg.mxu0
  %v1395 = vmul.f32 %v1392, 0.001953125
  %v1396 = vlaneseq
  %v1397 = vshrl.u32 %v1396, 7
  %v1398 = vsub.s32 0, %v1397
  %v1399 = vrot.slane %v1395, %v1398
  %v1400 = vsub.f32 %v1296, %v1399
  %v1401 = vsub.f32 %v1297, %v1399
  %v1402 = vsub.f32 %v1298, %v1399
  %v1403 = vsub.f32 %v1299, %v1399
  %v1404 = vmul.f32 %v1400, %v1400
  %v1405 = vmul.f32 %v1401, %v1401
  %v1406 = vmul.f32 %v1402, %v1402
  %v1407 = vmul.f32 %v1403, %v1403
  %v1408 = vadd.f32 %v1404, %v1405
  %v1409 = vadd.f32 %v1408, %v1406
  %v1410 = vadd.f32 %v1409, %v1407
  %v1411 = vrot.slane %v1410, 4
  %v1412 = vadd.f32 %v1410, %v1411
  %v1413 = vrot.slane %v1412, 2
  %v1414 = vadd.f32 %v1412, %v1413
  %v1415 = vrot.slane %v1414, 1
  %v1416 = vadd.f32 %v1414, %v1415
  %1417 = vmatprep.subr.mxu0 0.0
  %1418 = vmatpush1.msra.mxu0 %v1300
  %1419 = vmatprep.subr.mxu0 0.0
  %1420 = vmatpush1.msra.mxu0 %v1301
  %1421 = vmatprep.subr.mxu0 0.0
  %1422 = vmatpush1.msra.mxu0 %v1302
  %1423 = vmatprep.subr.mxu0 0.0
  %1424 = vmatpush1.msra.mxu0 %v1303
  %1425 = vmatprep.subr.mxu0 0.0
  %1426 = vmatpush1.msra.mxu0 %v1304
  %1427 = vmatprep.subr.mxu0 0.0
  %1428 = vmatpush1.msra.mxu0 %v1305
  %1429 = vmatprep.subr.mxu0 0.0
  %1430 = vmatpush1.msra.mxu0 %v1306
  %1431 = vmatprep.subr.mxu0 0.0
  %1432 = vmatpush1.msra.mxu0 %v1307
  %1433 = vmatprep.subr.mxu0 0.0
  %1434 = vmatpush1.msra.mxu0 %v1308
  %1435 = vmatprep.subr.mxu0 0.0
  %1436 = vmatpush1.msra.mxu0 %v1309
  %1437 = vmatprep.subr.mxu0 0.0
  %1438 = vmatpush1.msra.mxu0 %v1310
  %1439 = vmatprep.subr.mxu0 0.0
  %1440 = vmatpush1.msra.mxu0 %v1311
  %1441 = vmatprep.subr.mxu0 0.0
  %1442 = vmatpush1.msra.mxu0 %v1312
  %1443 = vmatprep.subr.mxu0 0.0
  %1444 = vmatpush1.msra.mxu0 %v1313
  %1445 = vmatprep.subr.mxu0 0.0
  %1446 = vmatpush1.msra.mxu0 %v1314
  %1447 = vmatprep.subr.mxu0 0.0
  %1448 = vmatpush1.msra.mxu0 %v1315
  %1449 = vmatprep.subr.mxu0 0.0
  %1450 = vmatpush1.msra.mxu0 0.0
  %1451 = vmatprep.subr.mxu0 0.0
  %1452 = vmatpush1.msra.mxu0 0.0
  %1453 = vmatprep.subr.mxu0 0.0
  %1454 = vmatpush1.msra.mxu0 0.0
  %1455 = vmatprep.subr.mxu0 0.0
  %1456 = vmatpush1.msra.mxu0 0.0
  %1457 = vmatprep.subr.mxu0 0.0
  %1458 = vmatpush1.msra.mxu0 0.0
  %1459 = vmatprep.subr.mxu0 0.0
  %1460 = vmatpush1.msra.mxu0 0.0
  %1461 = vmatprep.subr.mxu0 0.0
  %1462 = vmatpush1.msra.mxu0 0.0
  %1463 = vmatprep.subr.mxu0 0.0
  %1464 = vmatpush1.msra.mxu0 0.0
  %1465 = vmatprep.subr.mxu0 0.0
  %1466 = vmatpush1.msra.mxu0 0.0
  %1467 = vmatprep.subr.mxu0 0.0
  %1468 = vmatpush1.msra.mxu0 0.0
  %1469 = vmatprep.subr.mxu0 0.0
  %1470 = vmatpush1.msra.mxu0 0.0
  %1471 = vmatprep.subr.mxu0 0.0
  %1472 = vmatpush1.msra.mxu0 0.0
  %1473 = vmatprep.subr.mxu0 0.0
  %1474 = vmatpush1.msra.mxu0 0.0
  %1475 = vmatprep.subr.mxu0 0.0
  %1476 = vmatpush1.msra.mxu0 0.0
  %1477 = vmatprep.subr.mxu0 0.0
  %1478 = vmatpush1.msra.mxu0 0.0
  %1479 = vmatprep.subr.mxu0 0.0
  %1480 = vmatpush1.msra.mxu0 0.0
  %1481 = vmatprep.mubr.f32.mxu0 0.0
  %1482 = vmatmul.mubr.f32.gmra.mrb[0].mxu0 %v1416
  %v1483 = vpop.f32.mrb[0].mxu0
  %v1484 = vadd.f32 0.0, %v1483
  %v1485 = vpop.f32.mrb[0].mxu0
  %1486 = vdwg.mxu0
  %v1487 = vmul.f32 %v1484, 0.001953125
  %v1488 = vld [vmem:[%s6] sm:$0x1]
  %v1489 = vadd.f32 %v1487, 1e-05
  %v1490 = vrsqrt.pop %v1489
  %v1491 = vmul.f32 %v1488, %v1490
  %v1492 = vld [vmem:[%s7] sm:$0x1]
  %v1493 = vmul.f32 %v1395, %v1491
  %v1494 = vsub.f32 %v1492, %v1493
  %v1496 = vlaneseq
  %v1497 = vshrl.u32 %v1496, 7
  %v1498 = vsub.s32 0, %v1497
  %v1499 = vrot.slane %v1491, %v1498
  %v1501 = vmul.f32 %v1296, %v1499
  %v1502 = vmul.f32 %v1297, %v1499
  %v1503 = vmul.f32 %v1298, %v1499
  %v1504 = vmul.f32 %v1299, %v1499
  %v1505 = vadd.f32 %v485, %v1501
  %v1506 = vadd.f32 %v486, %v1502
  %v1507 = vadd.f32 %v487, %v1503
  %v1508 = vadd.f32 %v488, %v1504
  %v1510 = vlaneseq
  %v1511 = vshrl.u32 %v1510, 7
  %v1512 = vsub.s32 0, %v1511
  %v1513 = vrot.slane %v1494, %v1512
  %v1515 = vadd.f32 %v1505, %v1513
  %v1516 = vadd.f32 %v1506, %v1513
  %v1517 = vadd.f32 %v1507, %v1513
  %v1518 = vadd.f32 %v1508, %v1513
  %1519 = vst [vmem:[%s16] sm:$0xff] %v1515
  %1520 = vst [vmem:[%s16 + $0x8] sm:$0xff] %v1516
  %1521 = vst [vmem:[%s16 + $0x10] sm:$0xff] %v1517
  %1522 = vst [vmem:[%s16 + $0x18] sm:$0xff] %v1518
  %v1523 = vld [vmem:[%s11] sm:$0xff]
  %v1524 = vld [vmem:[%s11 + $0x8] sm:$0xff]
  %v1526 = vsel %vm275, %v1523, 0
  %v1529 = vsel %vm275, %v1524, 0
  %1531 = vmatprep.subr.mxu0 0.0
  %1532 = vmatpush1.msra.mxu0 %v1515
  %1533 = vmatprep.subr.mxu0 0.0
  %1534 = vmatpush1.msra.mxu0 %v1516
  %1535 = vmatprep.subr.mxu0 0.0
  %1536 = vmatpush1.msra.mxu0 %v1517
  %1537 = vmatprep.subr.mxu0 0.0
  %1538 = vmatpush1.msra.mxu0 %v1518
  %1539 = vmatprep.subr.mxu0 0.0
  %1540 = vmatpush1.msra.mxu0 0.0
  %1541 = vmatprep.subr.mxu0 0.0
  %1542 = vmatpush1.msra.mxu0 0.0
  %1543 = vmatprep.subr.mxu0 0.0
  %1544 = vmatpush1.msra.mxu0 0.0
  %1545 = vmatprep.subr.mxu0 0.0
  %1546 = vmatpush1.msra.mxu0 0.0
  %1547 = vmatprep.subr.mxu0 0.0
  %1548 = vmatpush1.msra.mxu0 0.0
  %1549 = vmatprep.subr.mxu0 0.0
  %1550 = vmatpush1.msra.mxu0 0.0
  %1551 = vmatprep.subr.mxu0 0.0
  %1552 = vmatpush1.msra.mxu0 0.0
  %1553 = vmatprep.subr.mxu0 0.0
  %1554 = vmatpush1.msra.mxu0 0.0
  %1555 = vmatprep.subr.mxu0 0.0
  %1556 = vmatpush1.msra.mxu0 0.0
  %1557 = vmatprep.subr.mxu0 0.0
  %1558 = vmatpush1.msra.mxu0 0.0
  %1559 = vmatprep.subr.mxu0 0.0
  %1560 = vmatpush1.msra.mxu0 0.0
  %1561 = vmatprep.subr.mxu0 0.0
  %1562 = vmatpush1.msra.mxu0 0.0
  %1563 = vmatprep.subr.mxu0 0.0
  %1564 = vmatpush1.msra.mxu0 0.0
  %1565 = vmatprep.subr.mxu0 0.0
  %1566 = vmatpush1.msra.mxu0 0.0
  %1567 = vmatprep.subr.mxu0 0.0
  %1568 = vmatpush1.msra.mxu0 0.0
  %1569 = vmatprep.subr.mxu0 0.0
  %1570 = vmatpush1.msra.mxu0 0.0
  %1571 = vmatprep.subr.mxu0 0.0
  %1572 = vmatpush1.msra.mxu0 0.0
  %1573 = vmatprep.subr.mxu0 0.0
  %1574 = vmatpush1.msra.mxu0 0.0
  %1575 = vmatprep.subr.mxu0 0.0
  %1576 = vmatpush1.msra.mxu0 0.0
  %1577 = vmatprep.subr.mxu0 0.0
  %1578 = vmatpush1.msra.mxu0 0.0
  %1579 = vmatprep.subr.mxu0 0.0
  %1580 = vmatpush1.msra.mxu0 0.0
  %1581 = vmatprep.subr.mxu0 0.0
  %1582 = vmatpush1.msra.mxu0 0.0
  %1583 = vmatprep.subr.mxu0 0.0
  %1584 = vmatpush1.msra.mxu0 0.0
  %1585 = vmatprep.subr.mxu0 0.0
  %1586 = vmatpush1.msra.mxu0 0.0
  %1587 = vmatprep.subr.mxu0 0.0
  %1588 = vmatpush1.msra.mxu0 0.0
  %1589 = vmatprep.subr.mxu0 0.0
  %1590 = vmatpush1.msra.mxu0 0.0
  %1591 = vmatprep.subr.mxu0 0.0
  %1592 = vmatpush1.msra.mxu0 0.0
  %1593 = vmatprep.subr.mxu0 0.0
  %1594 = vmatpush1.msra.mxu0 0.0
  %1595 = vmatprep.mubr.f32.mxu0 0.0
  %1596 = vmatmul.mubr.f32.gmra.mrb[0].mxu0 %v1526
  %v1597 = vpop.f32.mrb[0].mxu0
  %v1598 = vadd.f32 0.0, %v1597
  %v1599 = vpop.f32.mrb[0].mxu0
  %1600 = vmatprep.mubr.f32.mxu0 0.0
  %1601 = vmatmul.mubr.f32.gmra.mrb[0].mxu0 %v1529
  %v1602 = vpop.f32.mrb[0].mxu0
  %v1603 = vadd.f32 0.0, %v1602
  %v1604 = vpop.f32.mrb[0].mxu0
  %1605 = vdwg.mxu0
  %v1606 = vld [vmem:[%s12] sm:$0xff]
  %v1607 = vld [vmem:[%s12 + $0x8] sm:$0xff]
  %v1609 = vsel %vm275, %v1606, 0
  %v1612 = vsel %vm275, %v1607, 0
  %1614 = vmatprep.subr.mxu0 0.0
  %1615 = vmatpush1.msra.mxu0 %v1515
  %1616 = vmatprep.subr.mxu0 0.0
  %1617 = vmatpush1.msra.mxu0 %v1516
  %1618 = vmatprep.subr.mxu0 0.0
  %1619 = vmatpush1.msra.mxu0 %v1517
  %1620 = vmatprep.subr.mxu0 0.0
  %1621 = vmatpush1.msra.mxu0 %v1518
  %1622 = vmatprep.subr.mxu0 0.0
  %1623 = vmatpush1.msra.mxu0 0.0
  %1624 = vmatprep.subr.mxu0 0.0
  %1625 = vmatpush1.msra.mxu0 0.0
  %1626 = vmatprep.subr.mxu0 0.0
  %1627 = vmatpush1.msra.mxu0 0.0
  %1628 = vmatprep.subr.mxu0 0.0
  %1629 = vmatpush1.msra.mxu0 0.0
  %1630 = vmatprep.subr.mxu0 0.0
  %1631 = vmatpush1.msra.mxu0 0.0
  %1632 = vmatprep.subr.mxu0 0.0
  %1633 = vmatpush1.msra.mxu0 0.0
  %1634 = vmatprep.subr.mxu0 0.0
  %1635 = vmatpush1.msra.mxu0 0.0
  %1636 = vmatprep.subr.mxu0 0.0
  %1637 = vmatpush1.msra.mxu0 0.0
  %1638 = vmatprep.subr.mxu0 0.0
  %1639 = vmatpush1.msra.mxu0 0.0
  %1640 = vmatprep.subr.mxu0 0.0
  %1641 = vmatpush1.msra.mxu0 0.0
  %1642 = vmatprep.subr.mxu0 0.0
  %1643 = vmatpush1.msra.mxu0 0.0
  %1644 = vmatprep.subr.mxu0 0.0
  %1645 = vmatpush1.msra.mxu0 0.0
  %1646 = vmatprep.subr.mxu0 0.0
  %1647 = vmatpush1.msra.mxu0 0.0
  %1648 = vmatprep.subr.mxu0 0.0
  %1649 = vmatpush1.msra.mxu0 0.0
  %1650 = vmatprep.subr.mxu0 0.0
  %1651 = vmatpush1.msra.mxu0 0.0
  %1652 = vmatprep.subr.mxu0 0.0
  %1653 = vmatpush1.msra.mxu0 0.0
  %1654 = vmatprep.subr.mxu0 0.0
  %1655 = vmatpush1.msra.mxu0 0.0
  %1656 = vmatprep.subr.mxu0 0.0
  %1657 = vmatpush1.msra.mxu0 0.0
  %1658 = vmatprep.subr.mxu0 0.0
  %1659 = vmatpush1.msra.mxu0 0.0
  %1660 = vmatprep.subr.mxu0 0.0
  %1661 = vmatpush1.msra.mxu0 0.0
  %1662 = vmatprep.subr.mxu0 0.0
  %1663 = vmatpush1.msra.mxu0 0.0
  %1664 = vmatprep.subr.mxu0 0.0
  %1665 = vmatpush1.msra.mxu0 0.0
  %1666 = vmatprep.subr.mxu0 0.0
  %1667 = vmatpush1.msra.mxu0 0.0
  %1668 = vmatprep.subr.mxu0 0.0
  %1669 = vmatpush1.msra.mxu0 0.0
  %1670 = vmatprep.subr.mxu0 0.0
  %1671 = vmatpush1.msra.mxu0 0.0
  %1672 = vmatprep.subr.mxu0 0.0
  %1673 = vmatpush1.msra.mxu0 0.0
  %1674 = vmatprep.subr.mxu0 0.0
  %1675 = vmatpush1.msra.mxu0 0.0
  %1676 = vmatprep.subr.mxu0 0.0
  %1677 = vmatpush1.msra.mxu0 0.0
  %1678 = vmatprep.mubr.f32.mxu0 0.0
  %1679 = vmatmul.mubr.f32.gmra.mrb[0].mxu0 %v1609
  %v1680 = vpop.f32.mrb[0].mxu0
  %v1681 = vadd.f32 0.0, %v1680
  %v1682 = vpop.f32.mrb[0].mxu0
  %1683 = vmatprep.mubr.f32.mxu0 0.0
  %1684 = vmatmul.mubr.f32.gmra.mrb[0].mxu0 %v1612
  %v1685 = vpop.f32.mrb[0].mxu0
  %v1686 = vadd.f32 0.0, %v1685
  %v1687 = vpop.f32.mrb[0].mxu0
  %1688 = vdwg.mxu0
  %v1689 = vmax.f32 %v1598, %v1681
  %v1690 = vmax.f32 %v1603, %v1686
  %v1691 = vld [vmem:[%s13] sm:$0xff]
  %v1692 = vld [vmem:[%s13 + $0x8] sm:$0xff]
  %v1693 = vld [vmem:[%s13 + $0x10] sm:$0xff]
  %v1694 = vld [vmem:[%s13 + $0x18] sm:$0xff]
  %v1695 = vld [vmem:[%s13 + $0x20] sm:$0xff]
  %v1696 = vld [vmem:[%s13 + $0x28] sm:$0xff]
  %v1697 = vld [vmem:[%s13 + $0x30] sm:$0xff]
  %v1698 = vld [vmem:[%s13 + $0x38] sm:$0xff]
  %v1699 = vld [vmem:[%s13 + $0x40] sm:$0xff]
  %v1700 = vld [vmem:[%s13 + $0x48] sm:$0xff]
  %v1701 = vld [vmem:[%s13 + $0x50] sm:$0xff]
  %v1702 = vld [vmem:[%s13 + $0x58] sm:$0xff]
  %v1703 = vld [vmem:[%s13 + $0x60] sm:$0xff]
  %v1704 = vld [vmem:[%s13 + $0x68] sm:$0xff]
  %v1705 = vld [vmem:[%s13 + $0x70] sm:$0xff]
  %v1706 = vld [vmem:[%s13 + $0x78] sm:$0xff]
  %1707 = vmatprep.subr.mxu0 0.0
  %1708 = vmatpush1.msra.mxu0 %v1691
  %1709 = vmatprep.subr.mxu0 0.0
  %1710 = vmatpush1.msra.mxu0 %v1692
  %1711 = vmatprep.subr.mxu0 0.0
  %1712 = vmatpush1.msra.mxu0 %v1693
  %1713 = vmatprep.subr.mxu0 0.0
  %1714 = vmatpush1.msra.mxu0 %v1694
  %1715 = vmatprep.subr.mxu0 0.0
  %1716 = vmatpush1.msra.mxu0 %v1695
  %1717 = vmatprep.subr.mxu0 0.0
  %1718 = vmatpush1.msra.mxu0 %v1696
  %1719 = vmatprep.subr.mxu0 0.0
  %1720 = vmatpush1.msra.mxu0 %v1697
  %1721 = vmatprep.subr.mxu0 0.0
  %1722 = vmatpush1.msra.mxu0 %v1698
  %1723 = vmatprep.subr.mxu0 0.0
  %1724 = vmatpush1.msra.mxu0 %v1699
  %1725 = vmatprep.subr.mxu0 0.0
  %1726 = vmatpush1.msra.mxu0 %v1700
  %1727 = vmatprep.subr.mxu0 0.0
  %1728 = vmatpush1.msra.mxu0 %v1701
  %1729 = vmatprep.subr.mxu0 0.0
  %1730 = vmatpush1.msra.mxu0 %v1702
  %1731 = vmatprep.subr.mxu0 0.0
  %1732 = vmatpush1.msra.mxu0 %v1703
  %1733 = vmatprep.subr.mxu0 0.0
  %1734 = vmatpush1.msra.mxu0 %v1704
  %1735 = vmatprep.subr.mxu0 0.0
  %1736 = vmatpush1.msra.mxu0 %v1705
  %1737 = vmatprep.subr.mxu0 0.0
  %1738 = vmatpush1.msra.mxu0 %v1706
  %1739 = vmatprep.subr.mxu0 0.0
  %1740 = vmatpush1.msra.mxu0 0.0
  %1741 = vmatprep.subr.mxu0 0.0
  %1742 = vmatpush1.msra.mxu0 0.0
  %1743 = vmatprep.subr.mxu0 0.0
  %1744 = vmatpush1.msra.mxu0 0.0
  %1745 = vmatprep.subr.mxu0 0.0
  %1746 = vmatpush1.msra.mxu0 0.0
  %1747 = vmatprep.subr.mxu0 0.0
  %1748 = vmatpush1.msra.mxu0 0.0
  %1749 = vmatprep.subr.mxu0 0.0
  %1750 = vmatpush1.msra.mxu0 0.0
  %1751 = vmatprep.subr.mxu0 0.0
  %1752 = vmatpush1.msra.mxu0 0.0
  %1753 = vmatprep.subr.mxu0 0.0
  %1754 = vmatpush1.msra.mxu0 0.0
  %1755 = vmatprep.subr.mxu0 0.0
  %1756 = vmatpush1.msra.mxu0 0.0
  %1757 = vmatprep.subr.mxu0 0.0
  %1758 = vmatpush1.msra.mxu0 0.0
  %1759 = vmatprep.subr.mxu0 0.0
  %1760 = vmatpush1.msra.mxu0 0.0
  %1761 = vmatprep.subr.mxu0 0.0
  %1762 = vmatpush1.msra.mxu0 0.0
  %1763 = vmatprep.subr.mxu0 0.0
  %1764 = vmatpush1.msra.mxu0 0.0
  %1765 = vmatprep.subr.mxu0 0.0
  %1766 = vmatpush1.msra.mxu0 0.0
  %1767 = vmatprep.subr.mxu0 0.0
  %1768 = vmatpush1.msra.mxu0 0.0
  %1769 = vmatprep.subr.mxu0 0.0
  %1770 = vmatpush1.msra.mxu0 0.0
  %1771 = vmatprep.mubr.f32.mxu0 0.0
  %1772 = vmatmul.mubr.f32.gmra.mrb[0].mxu0 %v1689
  %v1773 = vpop.f32.mrb[0].mxu0
  %v1774 = vadd.f32 0.0, %v1773
  %v1775 = vpop.f32.mrb[0].mxu0
  %1776 = vmatprep.mubr.f32.mxu0 0.0
  %1777 = vmatmul.mubr.f32.gmra.mrb[0].mxu0 %v1690
  %v1778 = vpop.f32.mrb[0].mxu0
  %v1779 = vadd.f32 0.0, %v1778
  %v1780 = vpop.f32.mrb[0].mxu0
  %1781 = vdwg.mxu0
  %v1782 = vld [vmem:[%s14] sm:$0xff]
  %v1783 = vld [vmem:[%s14 + $0x8] sm:$0xff]
  %v1784 = vld [vmem:[%s14 + $0x10] sm:$0xff]
  %v1785 = vld [vmem:[%s14 + $0x18] sm:$0xff]
  %v1786 = vld [vmem:[%s14 + $0x20] sm:$0xff]
  %v1787 = vld [vmem:[%s14 + $0x28] sm:$0xff]
  %v1788 = vld [vmem:[%s14 + $0x30] sm:$0xff]
  %v1789 = vld [vmem:[%s14 + $0x38] sm:$0xff]
  %v1790 = vld [vmem:[%s14 + $0x40] sm:$0xff]
  %v1791 = vld [vmem:[%s14 + $0x48] sm:$0xff]
  %v1792 = vld [vmem:[%s14 + $0x50] sm:$0xff]
  %v1793 = vld [vmem:[%s14 + $0x58] sm:$0xff]
  %v1794 = vld [vmem:[%s14 + $0x60] sm:$0xff]
  %v1795 = vld [vmem:[%s14 + $0x68] sm:$0xff]
  %v1796 = vld [vmem:[%s14 + $0x70] sm:$0xff]
  %v1797 = vld [vmem:[%s14 + $0x78] sm:$0xff]
  %1798 = vmatprep.subr.mxu0 0.0
  %1799 = vmatpush1.msra.mxu0 %v1782
  %1800 = vmatprep.subr.mxu0 0.0
  %1801 = vmatpush1.msra.mxu0 %v1783
  %1802 = vmatprep.subr.mxu0 0.0
  %1803 = vmatpush1.msra.mxu0 %v1784
  %1804 = vmatprep.subr.mxu0 0.0
  %1805 = vmatpush1.msra.mxu0 %v1785
  %1806 = vmatprep.subr.mxu0 0.0
  %1807 = vmatpush1.msra.mxu0 %v1786
  %1808 = vmatprep.subr.mxu0 0.0
  %1809 = vmatpush1.msra.mxu0 %v1787
  %1810 = vmatprep.subr.mxu0 0.0
  %1811 = vmatpush1.msra.mxu0 %v1788
  %1812 = vmatprep.subr.mxu0 0.0
  %1813 = vmatpush1.msra.mxu0 %v1789
  %1814 = vmatprep.subr.mxu0 0.0
  %1815 = vmatpush1.msra.mxu0 %v1790
  %1816 = vmatprep.subr.mxu0 0.0
  %1817 = vmatpush1.msra.mxu0 %v1791
  %1818 = vmatprep.subr.mxu0 0.0
  %1819 = vmatpush1.msra.mxu0 %v1792
  %1820 = vmatprep.subr.mxu0 0.0
  %1821 = vmatpush1.msra.mxu0 %v1793
  %1822 = vmatprep.subr.mxu0 0.0
  %1823 = vmatpush1.msra.mxu0 %v1794
  %1824 = vmatprep.subr.mxu0 0.0
  %1825 = vmatpush1.msra.mxu0 %v1795
  %1826 = vmatprep.subr.mxu0 0.0
  %1827 = vmatpush1.msra.mxu0 %v1796
  %1828 = vmatprep.subr.mxu0 0.0
  %1829 = vmatpush1.msra.mxu0 %v1797
  %1830 = vmatprep.subr.mxu0 0.0
  %1831 = vmatpush1.msra.mxu0 0.0
  %1832 = vmatprep.subr.mxu0 0.0
  %1833 = vmatpush1.msra.mxu0 0.0
  %1834 = vmatprep.subr.mxu0 0.0
  %1835 = vmatpush1.msra.mxu0 0.0
  %1836 = vmatprep.subr.mxu0 0.0
  %1837 = vmatpush1.msra.mxu0 0.0
  %1838 = vmatprep.subr.mxu0 0.0
  %1839 = vmatpush1.msra.mxu0 0.0
  %1840 = vmatprep.subr.mxu0 0.0
  %1841 = vmatpush1.msra.mxu0 0.0
  %1842 = vmatprep.subr.mxu0 0.0
  %1843 = vmatpush1.msra.mxu0 0.0
  %1844 = vmatprep.subr.mxu0 0.0
  %1845 = vmatpush1.msra.mxu0 0.0
  %1846 = vmatprep.subr.mxu0 0.0
  %1847 = vmatpush1.msra.mxu0 0.0
  %1848 = vmatprep.subr.mxu0 0.0
  %1849 = vmatpush1.msra.mxu0 0.0
  %1850 = vmatprep.subr.mxu0 0.0
  %1851 = vmatpush1.msra.mxu0 0.0
  %1852 = vmatprep.subr.mxu0 0.0
  %1853 = vmatpush1.msra.mxu0 0.0
  %1854 = vmatprep.subr.mxu0 0.0
  %1855 = vmatpush1.msra.mxu0 0.0
  %1856 = vmatprep.subr.mxu0 0.0
  %1857 = vmatpush1.msra.mxu0 0.0
  %1858 = vmatprep.subr.mxu0 0.0
  %1859 = vmatpush1.msra.mxu0 0.0
  %1860 = vmatprep.subr.mxu0 0.0
  %1861 = vmatpush1.msra.mxu0 0.0
  %1862 = vmatprep.mubr.f32.mxu0 0.0
  %1863 = vmatmul.mubr.f32.gmra.mrb[0].mxu0 %v1689
  %v1864 = vpop.f32.mrb[0].mxu0
  %v1865 = vadd.f32 0.0, %v1864
  %v1866 = vpop.f32.mrb[0].mxu0
  %1867 = vmatprep.mubr.f32.mxu0 0.0
  %1868 = vmatmul.mubr.f32.gmra.mrb[0].mxu0 %v1690
  %v1869 = vpop.f32.mrb[0].mxu0
  %v1870 = vadd.f32 0.0, %v1869
  %v1871 = vpop.f32.mrb[0].mxu0
  %1872 = vdwg.mxu0
  %v1873 = vmax.f32 %v1774, %v1865
  %v1874 = vmax.f32 %v1779, %v1870
  %1875 = vst.msk [vmem:[%s15] sm:$0xff] %vm88, %v1873
  %1876 = vst.msk [vmem:[%s15 + $0x8] sm:$0xff] %vm88, %v1874
  // Predicated region
  $region62: #{downblock_forward.1} parent=0 // pred_check
    _
  $region63: #{downblock_forward.1} parent=0 // pred_check_branch
    %1878 = sbr.rel (0) target = $region65
  $region64: #{downblock_forward.1} parent=0 // pred_region
    _
  $region65: #{downblock_forward.1} parent=0 // pred_fallthru
    _
  // Predicated region
  $region66: #{downblock_forward.1} parent=0 // pred_check
    _
  $region67: #{downblock_forward.1} parent=0 // pred_check_branch
    %1880 = sbr.rel (0) target = $region69
  $region68: #{downblock_forward.1} parent=0 // pred_region
    _
  $region69: #{downblock_forward.1} parent=0 // pred_fallthru
    _
  // Predicated region
  $region70: #{downblock_forward.1} parent=0 // pred_check
    _
  $region71: #{downblock_forward.1} parent=0 // pred_check_branch
    %1882 = sbr.rel (0) target = $region73
  $region72: #{downblock_forward.1} parent=0 // pred_region
    _
  $region73: #{downblock_forward.1} parent=0 // pred_fallthru
    _
  // Predicated region
  $region74: #{downblock_forward.1} parent=0 // pred_check
    _
  $region75: #{downblock_forward.1} parent=0 // pred_check_branch
    %1884 = sbr.rel (0) target = $region77
  $region76: #{downblock_forward.1} parent=0 // pred_region
    _
  $region77: #{downblock_forward.1} parent=0 // pred_fallthru
    _

</llo_original>
